<compile_context>
chip_gen: v5e
topology: v5e:2x2
jax: 0.10.0
libtpu: 0.0.40
codegen_flags: <defaults>
</compile_context>

<pallas_src>
import math

import jax
import jax.numpy as jnp
from jax import lax
from jax.experimental import pallas as pl
from jax.experimental.pallas import tpu as pltpu


def lstm_chunk_kernel(x_ref, w_ih_ref, w_hh_ref, b_ref, out_ref,
                      gx_ref, h_ref, c_ref):
    """One time-chunk of the LSTM recurrence.

    x_ref:    (Tc, E)     VMEM bf16   input chunk (auto-pipelined)
    w_ih_ref: (E, 4*Hp)   VMEM bf16   gate order [i, f, o, g], H padded to Hp
    w_hh_ref: (Hp, 4*Hp)  VMEM bf16
    b_ref:    (1, 4*Hp)   VMEM f32    bias_ih + bias_hh
    out_ref:  (Tc, Hp)    VMEM f32    hidden states for this chunk
    gx_ref:   (Tc, 4*Hp)  VMEM f32    scratch: hoisted input projection
    h_ref, c_ref: (1, Hp) VMEM f32    scratch: recurrent state across grid steps
    """
    Tc, Hp = out_ref.shape

    # Zero-init (h0, c0) on the first chunk only; scratch persists across grid.
    @pl.when(pl.program_id(0) == 0)
    def _():
        h_ref[...] = jnp.zeros_like(h_ref)
        c_ref[...] = jnp.zeros_like(c_ref)

    # Hoisted input projection + bias for the whole chunk (one MXU matmul);
    # only h @ w_hh stays on the serial critical path.
    gx_ref[...] = (
        jnp.dot(x_ref[...], w_ih_ref[...], preferred_element_type=jnp.float32)
        + b_ref[...]
    )

    w_hh = w_hh_ref[...]                              # (Hp, 4*Hp) bf16

    h = h_ref[...]                                    # (1, Hp) f32
    c = c_ref[...]

    STORE_BLOCK = 8                                   # flush h rows as (8, Hp) slabs
    pending = []
    block_start = 0

    # Tc is a Python int -> fully unrolled within the chunk, all indices static.
    for t in range(Tc):
        gates = gx_ref[pl.ds(t, 1), :] + jnp.dot(
            h.astype(jnp.bfloat16), w_hh, preferred_element_type=jnp.float32
        )                                             # (1, 4*Hp) f32

        # Hp is a multiple of 128: every gate slice is lane/vreg aligned, so no
        # cross-lane realignment lands on the serial chain.  Gate order is
        # [i, f, o, g]: one sigmoid over 3*Hp, one tanh over Hp.
        sig = jax.nn.sigmoid(gates[:, 0:3 * Hp])      # (1, 3*Hp)
        i_g = sig[:, 0 * Hp:1 * Hp]
        f_g = sig[:, 1 * Hp:2 * Hp]
        o_g = sig[:, 2 * Hp:3 * Hp]
        g_g = jnp.tanh(gates[:, 3 * Hp:4 * Hp])

        c = f_g * c + i_g * g_g
        h = o_g * jnp.tanh(c)

        pending.append(h)
        if len(pending) == STORE_BLOCK or t == Tc - 1:
            rows = len(pending)
            out_ref[pl.ds(block_start, rows), :] = jnp.concatenate(pending, axis=0)
            block_start = t + 1
            pending = []

    h_ref[...] = h
    c_ref[...] = c


def lstm_forward(embeds, w_ih_p, w_hh_p, bias_p, hidden_dim, *, chunk=8):
    """embeds: (T, E) f32 -> lstm_out: (T, 1, H) f32 (PyTorch output convention)."""
    T, E = embeds.shape
    Hp = w_hh_p.shape[0]                              # padded hidden dim (x128)
    Tc = chunk
    T_pad = pl.cdiv(T, Tc) * Tc

    x = embeds.astype(jnp.bfloat16)
    if T_pad != T:
        # Zero rows only after the last real step -> real outputs unaffected.
        x = jnp.pad(x, ((0, T_pad - T), (0, 0)))

    out = pl.pallas_call(
        lstm_chunk_kernel,
        out_shape=jax.ShapeDtypeStruct((T_pad, Hp), jnp.float32),
        grid_spec=pltpu.PrefetchScalarGridSpec(
            num_scalar_prefetch=0,
            grid=(T_pad // Tc,),
            in_specs=[
                pl.BlockSpec((Tc, E), lambda i: (i, 0)),          # x chunk
                pl.BlockSpec((E, 4 * Hp), lambda i: (0, 0)),      # w_ih (resident)
                pl.BlockSpec((Hp, 4 * Hp), lambda i: (0, 0)),     # w_hh (resident)
                pl.BlockSpec((1, 4 * Hp), lambda i: (0, 0)),      # bias (resident)
            ],
            out_specs=pl.BlockSpec((Tc, Hp), lambda i: (i, 0)),
            scratch_shapes=[
                pltpu.VMEM((Tc, 4 * Hp), jnp.float32),            # gx chunk
                pltpu.VMEM((1, Hp), jnp.float32),                 # h carry
                pltpu.VMEM((1, Hp), jnp.float32),                 # c carry
            ],
        ),
        compiler_params=pltpu.CompilerParams(
            dimension_semantics=("arbitrary",)),                  # strictly serial recurrence
    )(x, w_ih_p, w_hh_p, bias_p)

    return out[:T, :hidden_dim].reshape(T, 1, hidden_dim)


def init_lstm_params(key, embedding_dim, hidden_dim):
    """PyTorch-layout init: uniform(-1/sqrt(H), 1/sqrt(H)), gate order [i,f,g,o]."""
    k1, k2, k3, k4 = jax.random.split(key, 4)
    bound = 1.0 / math.sqrt(hidden_dim)
    w_ih = jax.random.uniform(k1, (4 * hidden_dim, embedding_dim),
                              jnp.float32, -bound, bound)   # like weight_ih_l0
    w_hh = jax.random.uniform(k2, (4 * hidden_dim, hidden_dim),
                              jnp.float32, -bound, bound)   # like weight_hh_l0
    b_ih = jax.random.uniform(k3, (4 * hidden_dim,), jnp.float32, -bound, bound)
    b_hh = jax.random.uniform(k4, (4 * hidden_dim,), jnp.float32, -bound, bound)
    return w_ih, w_hh, b_ih, b_hh


def prepare_params(w_ih, w_hh, b_ih, b_hh, *, lane=128):
    """Host-side prep for the kernel layout.

    * transpose to (in_dim, 4H)
    * permute gates [i,f,g,o] -> [i,f,o,g] (contiguous sigmoid slab)
    * zero-pad each gate's H columns to Hp (multiple of 128) -> lane-dense,
      vreg-aligned gate slices; padded lanes stay exactly 0 through the
      recurrence given (h0, c0) = 0
    * zero-pad w_hh rows to Hp
    * cast weights to bf16 (f32 accumulation in-kernel); bias stays f32
    """
    H = w_hh.shape[1]
    Hp = ((H + lane - 1) // lane) * lane
    perm = jnp.concatenate([
        jnp.arange(0 * H, 1 * H),      # i
        jnp.arange(1 * H, 2 * H),      # f
        jnp.arange(3 * H, 4 * H),      # o
        jnp.arange(2 * H, 3 * H),      # g
    ])

    def pad_gates(mat):                # (rows, 4H) -> (rows, 4Hp), per-gate zero pad
        rows = mat.shape[0]
        g = mat.reshape(rows, 4, H)
        g = jnp.pad(g, ((0, 0), (0, 0), (0, Hp - H)))
        return g.reshape(rows, 4 * Hp)

    w_ih_p = pad_gates(jnp.transpose(w_ih)[:, perm]).astype(jnp.bfloat16)     # (E, 4Hp)
    w_hh_p = pad_gates(jnp.transpose(w_hh)[:, perm])                          # (H, 4Hp)
    w_hh_p = jnp.pad(w_hh_p, ((0, Hp - H), (0, 0))).astype(jnp.bfloat16)      # (Hp, 4Hp)
    bias_p = pad_gates((b_ih + b_hh)[perm].reshape(1, 4 * H)).astype(jnp.float32)
    return w_ih_p, w_hh_p, bias_p


def lstm_reference(embeds, w_ih, w_hh, b_ih, b_hh):
    """Pure-JAX f32 reference matching PyTorch nn.LSTM (gate order i,f,g,o)."""
    H = w_hh.shape[1]

    def step(carry, x_t):
        h, c = carry
        gates = x_t @ w_ih.T + h @ w_hh.T + b_ih + b_hh
        i = jax.nn.sigmoid(gates[0 * H:1 * H])
        f = jax.nn.sigmoid(gates[1 * H:2 * H])
        g = jnp.tanh(gates[2 * H:3 * H])
        o = jax.nn.sigmoid(gates[3 * H:4 * H])
        c = f * c + i * g
        h = o * jnp.tanh(c)
        return (h, c), h

    _, hs = lax.scan(step, (jnp.zeros(H), jnp.zeros(H)), embeds)
    return hs.reshape(embeds.shape[0], 1, H)


if __name__ == "__main__":
    SEQ_LEN = 8
    EMBEDDING_DIM = 16
    HIDDEN_DIM = 32

    key = jax.random.PRNGKey(0)
    k_x, k_p = jax.random.split(key)

    embeds = jax.random.normal(k_x, (SEQ_LEN, EMBEDDING_DIM), jnp.float32)
    w_ih, w_hh, b_ih, b_hh = init_lstm_params(k_p, EMBEDDING_DIM, HIDDEN_DIM)
    w_ih_p, w_hh_p, bias_p = prepare_params(w_ih, w_hh, b_ih, b_hh)

    lstm_out = lstm_forward(embeds, w_ih_p, w_hh_p, bias_p, HIDDEN_DIM)
    lstm_out = jax.block_until_ready(lstm_out)

    assert lstm_out.shape == (SEQ_LEN, 1, HIDDEN_DIM)
    assert jnp.all(jnp.isfinite(lstm_out))

    # Tolerance check against an f32 reference (bf16 matmul operands compound
    # over T steps; 3e-2 abs is generous at T=8, H=32 with |h| <= 1).
    ref = lstm_reference(embeds, w_ih, w_hh, b_ih, b_hh)
    max_err = float(jnp.max(jnp.abs(lstm_out - ref)))
    assert max_err < 3e-2, f"max abs err vs f32 reference: {max_err}"

    print("KERNEL_OK")
</pallas_src>

<mosaic_0001>
module attributes {stable_mosaic.version = 11 : i64} {
  func.func @lstm_chunk_kernel(%arg0: i32, %arg1: memref<8x16xbf16, #tpu.memory_space<vmem>>, %arg2: memref<16x512xbf16, #tpu.memory_space<vmem>>, %arg3: memref<128x512xbf16, #tpu.memory_space<vmem>>, %arg4: memref<1x512xf32, #tpu.memory_space<vmem>>, %arg5: memref<8x128xf32, #tpu.memory_space<vmem>>, %arg6: memref<8x512xf32, #tpu.memory_space<vmem>>, %arg7: memref<1x128xf32, #tpu.memory_space<vmem>>, %arg8: memref<1x128xf32, #tpu.memory_space<vmem>>) attributes {dimension_semantics = [#tpu.dimension_semantics<arbitrary>], iteration_bounds = array<i64: 1>, scalar_prefetch = 0 : i64, scratch_operands = 3 : i64, tpu.core_type = #tpu.core_type<tc>, window_params = [{transform_indices = @transform_0, window_bounds = array<i64: 8, 16>}, {pipeline_mode = #tpu.pipeline_mode<synchronous>, transform_indices = @transform_1, window_bounds = array<i64: 16, 512>}, {pipeline_mode = #tpu.pipeline_mode<synchronous>, transform_indices = @transform_2, window_bounds = array<i64: 128, 512>}, {pipeline_mode = #tpu.pipeline_mode<synchronous>, transform_indices = @transform_3, window_bounds = array<i64: 1, 512>}, {transform_indices = @transform_4, window_bounds = array<i64: 8, 128>}]} {
    %c0_i32 = arith.constant 0 : i32
    %0 = arith.cmpi eq, %arg0, %c0_i32 : i32
    %1 = arith.extui %0 : i1 to i32
    %c0_i32_0 = arith.constant 0 : i32
    %2 = arith.cmpi ne, %1, %c0_i32_0 : i32
    scf.if %2 {
      %cst_45 = arith.constant 0.000000e+00 : f32
      %177 = vector.broadcast %cst_45 : f32 to vector<1x128xf32>
      %c0_46 = arith.constant 0 : index
      %c0_47 = arith.constant 0 : index
      %178 = vector.load %arg7[%c0_46, %c0_47] : memref<1x128xf32, #tpu.memory_space<vmem>>, vector<1x128xf32>
      tpu.vector_store %arg7[%c0_46, %c0_47], %177 {strides = array<i32>} : memref<1x128xf32, #tpu.memory_space<vmem>>, vector<1x128xf32>,
      %cst_48 = arith.constant 0.000000e+00 : f32
      %179 = vector.broadcast %cst_48 : f32 to vector<1x128xf32>
      %c0_49 = arith.constant 0 : index
      %c0_50 = arith.constant 0 : index
      %180 = vector.load %arg8[%c0_49, %c0_50] : memref<1x128xf32, #tpu.memory_space<vmem>>, vector<1x128xf32>
      tpu.vector_store %arg8[%c0_49, %c0_50], %179 {strides = array<i32>} : memref<1x128xf32, #tpu.memory_space<vmem>>, vector<1x128xf32>,
    } else {
    }
    %c0 = arith.constant 0 : index
    %c0_1 = arith.constant 0 : index
    %3 = vector.load %arg1[%c0, %c0_1] : memref<8x16xbf16, #tpu.memory_space<vmem>>, vector<8x16xbf16>
    %c0_2 = arith.constant 0 : index
    %c0_3 = arith.constant 0 : index
    %4 = vector.load %arg2[%c0_2, %c0_3] : memref<16x512xbf16, #tpu.memory_space<vmem>>, vector<16x512xbf16>
    %cst = arith.constant dense<0.000000e+00> : vector<8x512xf32>
    %5 = tpu.matmul %3, %4, %cst {dimension_numbers = #tpu.dot_dimension_numbers<[1], [0], [0], [1], [0, 0, 1, 1], [], []>} : vector<8x16xbf16>, vector<16x512xbf16>, vector<8x512xf32> -> vector<8x512xf32>
    %c0_4 = arith.constant 0 : index
    %c0_5 = arith.constant 0 : index
    %6 = vector.load %arg4[%c0_4, %c0_5] : memref<1x512xf32, #tpu.memory_space<vmem>>, vector<1x512xf32>
    %7 = vector.broadcast %6 : vector<1x512xf32> to vector<8x512xf32>
    %8 = arith.addf %5, %7 : vector<8x512xf32>
    %c0_6 = arith.constant 0 : index
    %c0_7 = arith.constant 0 : index
    %9 = vector.load %arg6[%c0_6, %c0_7] : memref<8x512xf32, #tpu.memory_space<vmem>>, vector<8x512xf32>
    tpu.vector_store %arg6[%c0_6, %c0_7], %8 {strides = array<i32>} : memref<8x512xf32, #tpu.memory_space<vmem>>, vector<8x512xf32>,
    %c0_8 = arith.constant 0 : index
    %c0_9 = arith.constant 0 : index
    %10 = vector.load %arg3[%c0_8, %c0_9] : memref<128x512xbf16, #tpu.memory_space<vmem>>, vector<128x512xbf16>
    %c0_10 = arith.constant 0 : index
    %c0_11 = arith.constant 0 : index
    %11 = vector.load %arg7[%c0_10, %c0_11] : memref<1x128xf32, #tpu.memory_space<vmem>>, vector<1x128xf32>
    %c0_12 = arith.constant 0 : index
    %c0_13 = arith.constant 0 : index
    %12 = vector.load %arg8[%c0_12, %c0_13] : memref<1x128xf32, #tpu.memory_space<vmem>>, vector<1x128xf32>
    %c0_14 = arith.constant 0 : index
    %c0_15 = arith.constant 0 : index
    %13 = vector.load %arg6[%c0_14, %c0_15] : memref<8x512xf32, #tpu.memory_space<vmem>>, vector<1x512xf32>
    %14 = arith.truncf %11 : vector<1x128xf32> to vector<1x128xbf16>
    %cst_16 = arith.constant dense<0.000000e+00> : vector<1x512xf32>
    %15 = tpu.matmul %14, %10, %cst_16 {dimension_numbers = #tpu.dot_dimension_numbers<[1], [0], [0], [1], [0, 0, 1, 1], [], []>} : vector<1x128xbf16>, vector<128x512xbf16>, vector<1x512xf32> -> vector<1x512xf32>
    %16 = arith.addf %13, %15 : vector<1x512xf32>
    %17 = vector.extract_strided_slice %16 {offsets = [0, 0], sizes = [1, 384], strides = [1, 1]} : vector<1x512xf32> to vector<1x384xf32>
    %18 = arith.negf %17 : vector<1x384xf32>
    %19 = math.exp %18 : vector<1x384xf32>
    %cst_17 = arith.constant 1.000000e+00 : f32
    %20 = vector.broadcast %cst_17 : f32 to vector<1x384xf32>
    %21 = arith.addf %20, %19 : vector<1x384xf32>
    %22 = arith.divf %20, %21 : vector<1x384xf32>
    %23 = vector.extract_strided_slice %22 {offsets = [0, 0], sizes = [1, 128], strides = [1, 1]} : vector<1x384xf32> to vector<1x128xf32>
    %24 = vector.extract_strided_slice %22 {offsets = [0, 128], sizes = [1, 128], strides = [1, 1]} : vector<1x384xf32> to vector<1x128xf32>
    %25 = vector.extract_strided_slice %22 {offsets = [0, 256], sizes = [1, 128], strides = [1, 1]} : vector<1x384xf32> to vector<1x128xf32>
    %26 = vector.extract_strided_slice %16 {offsets = [0, 384], sizes = [1, 128], strides = [1, 1]} : vector<1x512xf32> to vector<1x128xf32>
    %27 = math.tanh %26 : vector<1x128xf32>
    %28 = arith.mulf %24, %12 : vector<1x128xf32>
    %29 = arith.mulf %23, %27 : vector<1x128xf32>
    %30 = arith.addf %28, %29 : vector<1x128xf32>
    %31 = math.tanh %30 : vector<1x128xf32>
    %32 = arith.mulf %25, %31 : vector<1x128xf32>
    %c1 = arith.constant 1 : index
    %c0_18 = arith.constant 0 : index
    %33 = vector.load %arg6[%c1, %c0_18] : memref<8x512xf32, #tpu.memory_space<vmem>>, vector<1x512xf32>
    %34 = arith.truncf %32 : vector<1x128xf32> to vector<1x128xbf16>
    %cst_19 = arith.constant dense<0.000000e+00> : vector<1x512xf32>
    %35 = tpu.matmul %34, %10, %cst_19 {dimension_numbers = #tpu.dot_dimension_numbers<[1], [0], [0], [1], [0, 0, 1, 1], [], []>} : vector<1x128xbf16>, vector<128x512xbf16>, vector<1x512xf32> -> vector<1x512xf32>
    %36 = arith.addf %33, %35 : vector<1x512xf32>
    %37 = vector.extract_strided_slice %36 {offsets = [0, 0], sizes = [1, 384], strides = [1, 1]} : vector<1x512xf32> to vector<1x384xf32>
    %38 = arith.negf %37 : vector<1x384xf32>
    %39 = math.exp %38 : vector<1x384xf32>
    %cst_20 = arith.constant 1.000000e+00 : f32
    %40 = vector.broadcast %cst_20 : f32 to vector<1x384xf32>
    %41 = arith.addf %40, %39 : vector<1x384xf32>
    %42 = arith.divf %40, %41 : vector<1x384xf32>
    %43 = vector.extract_strided_slice %42 {offsets = [0, 0], sizes = [1, 128], strides = [1, 1]} : vector<1x384xf32> to vector<1x128xf32>
    %44 = vector.extract_strided_slice %42 {offsets = [0, 128], sizes = [1, 128], strides = [1, 1]} : vector<1x384xf32> to vector<1x128xf32>
    %45 = vector.extract_strided_slice %42 {offsets = [0, 256], sizes = [1, 128], strides = [1, 1]} : vector<1x384xf32> to vector<1x128xf32>
    %46 = vector.extract_strided_slice %36 {offsets = [0, 384], sizes = [1, 128], strides = [1, 1]} : vector<1x512xf32> to vector<1x128xf32>
    %47 = math.tanh %46 : vector<1x128xf32>
    %48 = arith.mulf %44, %30 : vector<1x128xf32>
    %49 = arith.mulf %43, %47 : vector<1x128xf32>
    %50 = arith.addf %48, %49 : vector<1x128xf32>
    %51 = math.tanh %50 : vector<1x128xf32>
    %52 = arith.mulf %45, %51 : vector<1x128xf32>
    %c2 = arith.constant 2 : index
    %c0_21 = arith.constant 0 : index
    %53 = vector.load %arg6[%c2, %c0_21] : memref<8x512xf32, #tpu.memory_space<vmem>>, vector<1x512xf32>
    %54 = arith.truncf %52 : vector<1x128xf32> to vector<1x128xbf16>
    %cst_22 = arith.constant dense<0.000000e+00> : vector<1x512xf32>
    %55 = tpu.matmul %54, %10, %cst_22 {dimension_numbers = #tpu.dot_dimension_numbers<[1], [0], [0], [1], [0, 0, 1, 1], [], []>} : vector<1x128xbf16>, vector<128x512xbf16>, vector<1x512xf32> -> vector<1x512xf32>
    %56 = arith.addf %53, %55 : vector<1x512xf32>
    %57 = vector.extract_strided_slice %56 {offsets = [0, 0], sizes = [1, 384], strides = [1, 1]} : vector<1x512xf32> to vector<1x384xf32>
    %58 = arith.negf %57 : vector<1x384xf32>
    %59 = math.exp %58 : vector<1x384xf32>
    %cst_23 = arith.constant 1.000000e+00 : f32
    %60 = vector.broadcast %cst_23 : f32 to vector<1x384xf32>
    %61 = arith.addf %60, %59 : vector<1x384xf32>
    %62 = arith.divf %60, %61 : vector<1x384xf32>
    %63 = vector.extract_strided_slice %62 {offsets = [0, 0], sizes = [1, 128], strides = [1, 1]} : vector<1x384xf32> to vector<1x128xf32>
    %64 = vector.extract_strided_slice %62 {offsets = [0, 128], sizes = [1, 128], strides = [1, 1]} : vector<1x384xf32> to vector<1x128xf32>
    %65 = vector.extract_strided_slice %62 {offsets = [0, 256], sizes = [1, 128], strides = [1, 1]} : vector<1x384xf32> to vector<1x128xf32>
    %66 = vector.extract_strided_slice %56 {offsets = [0, 384], sizes = [1, 128], strides = [1, 1]} : vector<1x512xf32> to vector<1x128xf32>
    %67 = math.tanh %66 : vector<1x128xf32>
    %68 = arith.mulf %64, %50 : vector<1x128xf32>
    %69 = arith.mulf %63, %67 : vector<1x128xf32>
    %70 = arith.addf %68, %69 : vector<1x128xf32>
    %71 = math.tanh %70 : vector<1x128xf32>
    %72 = arith.mulf %65, %71 : vector<1x128xf32>
    %c3 = arith.constant 3 : index
    %c0_24 = arith.constant 0 : index
    %73 = vector.load %arg6[%c3, %c0_24] : memref<8x512xf32, #tpu.memory_space<vmem>>, vector<1x512xf32>
    %74 = arith.truncf %72 : vector<1x128xf32> to vector<1x128xbf16>
    %cst_25 = arith.constant dense<0.000000e+00> : vector<1x512xf32>
    %75 = tpu.matmul %74, %10, %cst_25 {dimension_numbers = #tpu.dot_dimension_numbers<[1], [0], [0], [1], [0, 0, 1, 1], [], []>} : vector<1x128xbf16>, vector<128x512xbf16>, vector<1x512xf32> -> vector<1x512xf32>
    %76 = arith.addf %73, %75 : vector<1x512xf32>
    %77 = vector.extract_strided_slice %76 {offsets = [0, 0], sizes = [1, 384], strides = [1, 1]} : vector<1x512xf32> to vector<1x384xf32>
    %78 = arith.negf %77 : vector<1x384xf32>
    %79 = math.exp %78 : vector<1x384xf32>
    %cst_26 = arith.constant 1.000000e+00 : f32
    %80 = vector.broadcast %cst_26 : f32 to vector<1x384xf32>
    %81 = arith.addf %80, %79 : vector<1x384xf32>
    %82 = arith.divf %80, %81 : vector<1x384xf32>
    %83 = vector.extract_strided_slice %82 {offsets = [0, 0], sizes = [1, 128], strides = [1, 1]} : vector<1x384xf32> to vector<1x128xf32>
    %84 = vector.extract_strided_slice %82 {offsets = [0, 128], sizes = [1, 128], strides = [1, 1]} : vector<1x384xf32> to vector<1x128xf32>
    %85 = vector.extract_strided_slice %82 {offsets = [0, 256], sizes = [1, 128], strides = [1, 1]} : vector<1x384xf32> to vector<1x128xf32>
    %86 = vector.extract_strided_slice %76 {offsets = [0, 384], sizes = [1, 128], strides = [1, 1]} : vector<1x512xf32> to vector<1x128xf32>
    %87 = math.tanh %86 : vector<1x128xf32>
    %88 = arith.mulf %84, %70 : vector<1x128xf32>
    %89 = arith.mulf %83, %87 : vector<1x128xf32>
    %90 = arith.addf %88, %89 : vector<1x128xf32>
    %91 = math.tanh %90 : vector<1x128xf32>
    %92 = arith.mulf %85, %91 : vector<1x128xf32>
    %c4 = arith.constant 4 : index
    %c0_27 = arith.constant 0 : index
    %93 = vector.load %arg6[%c4, %c0_27] : memref<8x512xf32, #tpu.memory_space<vmem>>, vector<1x512xf32>
    %94 = arith.truncf %92 : vector<1x128xf32> to vector<1x128xbf16>
    %cst_28 = arith.constant dense<0.000000e+00> : vector<1x512xf32>
    %95 = tpu.matmul %94, %10, %cst_28 {dimension_numbers = #tpu.dot_dimension_numbers<[1], [0], [0], [1], [0, 0, 1, 1], [], []>} : vector<1x128xbf16>, vector<128x512xbf16>, vector<1x512xf32> -> vector<1x512xf32>
    %96 = arith.addf %93, %95 : vector<1x512xf32>
    %97 = vector.extract_strided_slice %96 {offsets = [0, 0], sizes = [1, 384], strides = [1, 1]} : vector<1x512xf32> to vector<1x384xf32>
    %98 = arith.negf %97 : vector<1x384xf32>
    %99 = math.exp %98 : vector<1x384xf32>
    %cst_29 = arith.constant 1.000000e+00 : f32
    %100 = vector.broadcast %cst_29 : f32 to vector<1x384xf32>
    %101 = arith.addf %100, %99 : vector<1x384xf32>
    %102 = arith.divf %100, %101 : vector<1x384xf32>
    %103 = vector.extract_strided_slice %102 {offsets = [0, 0], sizes = [1, 128], strides = [1, 1]} : vector<1x384xf32> to vector<1x128xf32>
    %104 = vector.extract_strided_slice %102 {offsets = [0, 128], sizes = [1, 128], strides = [1, 1]} : vector<1x384xf32> to vector<1x128xf32>
    %105 = vector.extract_strided_slice %102 {offsets = [0, 256], sizes = [1, 128], strides = [1, 1]} : vector<1x384xf32> to vector<1x128xf32>
    %106 = vector.extract_strided_slice %96 {offsets = [0, 384], sizes = [1, 128], strides = [1, 1]} : vector<1x512xf32> to vector<1x128xf32>
    %107 = math.tanh %106 : vector<1x128xf32>
    %108 = arith.mulf %104, %90 : vector<1x128xf32>
    %109 = arith.mulf %103, %107 : vector<1x128xf32>
    %110 = arith.addf %108, %109 : vector<1x128xf32>
    %111 = math.tanh %110 : vector<1x128xf32>
    %112 = arith.mulf %105, %111 : vector<1x128xf32>
    %c5 = arith.constant 5 : index
    %c0_30 = arith.constant 0 : index
    %113 = vector.load %arg6[%c5, %c0_30] : memref<8x512xf32, #tpu.memory_space<vmem>>, vector<1x512xf32>
    %114 = arith.truncf %112 : vector<1x128xf32> to vector<1x128xbf16>
    %cst_31 = arith.constant dense<0.000000e+00> : vector<1x512xf32>
    %115 = tpu.matmul %114, %10, %cst_31 {dimension_numbers = #tpu.dot_dimension_numbers<[1], [0], [0], [1], [0, 0, 1, 1], [], []>} : vector<1x128xbf16>, vector<128x512xbf16>, vector<1x512xf32> -> vector<1x512xf32>
    %116 = arith.addf %113, %115 : vector<1x512xf32>
    %117 = vector.extract_strided_slice %116 {offsets = [0, 0], sizes = [1, 384], strides = [1, 1]} : vector<1x512xf32> to vector<1x384xf32>
    %118 = arith.negf %117 : vector<1x384xf32>
    %119 = math.exp %118 : vector<1x384xf32>
    %cst_32 = arith.constant 1.000000e+00 : f32
    %120 = vector.broadcast %cst_32 : f32 to vector<1x384xf32>
    %121 = arith.addf %120, %119 : vector<1x384xf32>
    %122 = arith.divf %120, %121 : vector<1x384xf32>
    %123 = vector.extract_strided_slice %122 {offsets = [0, 0], sizes = [1, 128], strides = [1, 1]} : vector<1x384xf32> to vector<1x128xf32>
    %124 = vector.extract_strided_slice %122 {offsets = [0, 128], sizes = [1, 128], strides = [1, 1]} : vector<1x384xf32> to vector<1x128xf32>
    %125 = vector.extract_strided_slice %122 {offsets = [0, 256], sizes = [1, 128], strides = [1, 1]} : vector<1x384xf32> to vector<1x128xf32>
    %126 = vector.extract_strided_slice %116 {offsets = [0, 384], sizes = [1, 128], strides = [1, 1]} : vector<1x512xf32> to vector<1x128xf32>
    %127 = math.tanh %126 : vector<1x128xf32>
    %128 = arith.mulf %124, %110 : vector<1x128xf32>
    %129 = arith.mulf %123, %127 : vector<1x128xf32>
    %130 = arith.addf %128, %129 : vector<1x128xf32>
    %131 = math.tanh %130 : vector<1x128xf32>
    %132 = arith.mulf %125, %131 : vector<1x128xf32>
    %c6 = arith.constant 6 : index
    %c0_33 = arith.constant 0 : index
    %133 = vector.load %arg6[%c6, %c0_33] : memref<8x512xf32, #tpu.memory_space<vmem>>, vector<1x512xf32>
    %134 = arith.truncf %132 : vector<1x128xf32> to vector<1x128xbf16>
    %cst_34 = arith.constant dense<0.000000e+00> : vector<1x512xf32>
    %135 = tpu.matmul %134, %10, %cst_34 {dimension_numbers = #tpu.dot_dimension_numbers<[1], [0], [0], [1], [0, 0, 1, 1], [], []>} : vector<1x128xbf16>, vector<128x512xbf16>, vector<1x512xf32> -> vector<1x512xf32>
    %136 = arith.addf %133, %135 : vector<1x512xf32>
    %137 = vector.extract_strided_slice %136 {offsets = [0, 0], sizes = [1, 384], strides = [1, 1]} : vector<1x512xf32> to vector<1x384xf32>
    %138 = arith.negf %137 : vector<1x384xf32>
    %139 = math.exp %138 : vector<1x384xf32>
    %cst_35 = arith.constant 1.000000e+00 : f32
    %140 = vector.broadcast %cst_35 : f32 to vector<1x384xf32>
    %141 = arith.addf %140, %139 : vector<1x384xf32>
    %142 = arith.divf %140, %141 : vector<1x384xf32>
    %143 = vector.extract_strided_slice %142 {offsets = [0, 0], sizes = [1, 128], strides = [1, 1]} : vector<1x384xf32> to vector<1x128xf32>
    %144 = vector.extract_strided_slice %142 {offsets = [0, 128], sizes = [1, 128], strides = [1, 1]} : vector<1x384xf32> to vector<1x128xf32>
    %145 = vector.extract_strided_slice %142 {offsets = [0, 256], sizes = [1, 128], strides = [1, 1]} : vector<1x384xf32> to vector<1x128xf32>
    %146 = vector.extract_strided_slice %136 {offsets = [0, 384], sizes = [1, 128], strides = [1, 1]} : vector<1x512xf32> to vector<1x128xf32>
    %147 = math.tanh %146 : vector<1x128xf32>
    %148 = arith.mulf %144, %130 : vector<1x128xf32>
    %149 = arith.mulf %143, %147 : vector<1x128xf32>
    %150 = arith.addf %148, %149 : vector<1x128xf32>
    %151 = math.tanh %150 : vector<1x128xf32>
    %152 = arith.mulf %145, %151 : vector<1x128xf32>
    %c7 = arith.constant 7 : index
    %c0_36 = arith.constant 0 : index
    %153 = vector.load %arg6[%c7, %c0_36] : memref<8x512xf32, #tpu.memory_space<vmem>>, vector<1x512xf32>
    %154 = arith.truncf %152 : vector<1x128xf32> to vector<1x128xbf16>
    %cst_37 = arith.constant dense<0.000000e+00> : vector<1x512xf32>
    %155 = tpu.matmul %154, %10, %cst_37 {dimension_numbers = #tpu.dot_dimension_numbers<[1], [0], [0], [1], [0, 0, 1, 1], [], []>} : vector<1x128xbf16>, vector<128x512xbf16>, vector<1x512xf32> -> vector<1x512xf32>
    %156 = arith.addf %153, %155 : vector<1x512xf32>
    %157 = vector.extract_strided_slice %156 {offsets = [0, 0], sizes = [1, 384], strides = [1, 1]} : vector<1x512xf32> to vector<1x384xf32>
    %158 = arith.negf %157 : vector<1x384xf32>
    %159 = math.exp %158 : vector<1x384xf32>
    %cst_38 = arith.constant 1.000000e+00 : f32
    %160 = vector.broadcast %cst_38 : f32 to vector<1x384xf32>
    %161 = arith.addf %160, %159 : vector<1x384xf32>
    %162 = arith.divf %160, %161 : vector<1x384xf32>
    %163 = vector.extract_strided_slice %162 {offsets = [0, 0], sizes = [1, 128], strides = [1, 1]} : vector<1x384xf32> to vector<1x128xf32>
    %164 = vector.extract_strided_slice %162 {offsets = [0, 128], sizes = [1, 128], strides = [1, 1]} : vector<1x384xf32> to vector<1x128xf32>
    %165 = vector.extract_strided_slice %162 {offsets = [0, 256], sizes = [1, 128], strides = [1, 1]} : vector<1x384xf32> to vector<1x128xf32>
    %166 = vector.extract_strided_slice %156 {offsets = [0, 384], sizes = [1, 128], strides = [1, 1]} : vector<1x512xf32> to vector<1x128xf32>
    %167 = math.tanh %166 : vector<1x128xf32>
    %168 = arith.mulf %164, %150 : vector<1x128xf32>
    %169 = arith.mulf %163, %167 : vector<1x128xf32>
    %170 = arith.addf %168, %169 : vector<1x128xf32>
    %171 = math.tanh %170 : vector<1x128xf32>
    %172 = arith.mulf %165, %171 : vector<1x128xf32>
    %173 = tpu.concatenate %32, %52, %72, %92, %112, %132, %152, %172 in 0 : vector<1x128xf32>, vector<1x128xf32>, vector<1x128xf32>, vector<1x128xf32>, vector<1x128xf32>, vector<1x128xf32>, vector<1x128xf32>, vector<1x128xf32> -> vector<8x128xf32>
    %c0_39 = arith.constant 0 : index
    %c0_40 = arith.constant 0 : index
    %174 = vector.load %arg5[%c0_39, %c0_40] : memref<8x128xf32, #tpu.memory_space<vmem>>, vector<8x128xf32>
    tpu.vector_store %arg5[%c0_39, %c0_40], %173 {strides = array<i32>} : memref<8x128xf32, #tpu.memory_space<vmem>>, vector<8x128xf32>,
    %c0_41 = arith.constant 0 : index
    %c0_42 = arith.constant 0 : index
    %175 = vector.load %arg7[%c0_41, %c0_42] : memref<1x128xf32, #tpu.memory_space<vmem>>, vector<1x128xf32>
    tpu.vector_store %arg7[%c0_41, %c0_42], %172 {strides = array<i32>} : memref<1x128xf32, #tpu.memory_space<vmem>>, vector<1x128xf32>,
    %c0_43 = arith.constant 0 : index
    %c0_44 = arith.constant 0 : index
    %176 = vector.load %arg8[%c0_43, %c0_44] : memref<1x128xf32, #tpu.memory_space<vmem>>, vector<1x128xf32>
    tpu.vector_store %arg8[%c0_43, %c0_44], %170 {strides = array<i32>} : memref<1x128xf32, #tpu.memory_space<vmem>>, vector<1x128xf32>,
    return
  }
  func.func @transform_0(%arg0: i32) -> (i32, i32) {
    %c0_i32 = arith.constant 0 : i32
    %c0_i32_0 = arith.constant 0 : i32
    return %arg0, %c0_i32 : i32, i32
  }
  func.func @transform_1(%arg0: i32) -> (i32, i32) {
    %c0_i32 = arith.constant 0 : i32
    %c0_i32_0 = arith.constant 0 : i32
    %c0_i32_1 = arith.constant 0 : i32
    return %c0_i32, %c0_i32_0 : i32, i32
  }
  func.func @transform_2(%arg0: i32) -> (i32, i32) {
    %c0_i32 = arith.constant 0 : i32
    %c0_i32_0 = arith.constant 0 : i32
    %c0_i32_1 = arith.constant 0 : i32
    return %c0_i32, %c0_i32_0 : i32, i32
  }
  func.func @transform_3(%arg0: i32) -> (i32, i32) {
    %c0_i32 = arith.constant 0 : i32
    %c0_i32_0 = arith.constant 0 : i32
    %c0_i32_1 = arith.constant 0 : i32
    return %c0_i32, %c0_i32_0 : i32, i32
  }
  func.func @transform_4(%arg0: i32) -> (i32, i32) {
    %c0_i32 = arith.constant 0 : i32
    %c0_i32_0 = arith.constant 0 : i32
    return %arg0, %c0_i32 : i32, i32
  }
}

</mosaic_0001>

<llo_original>
// kernel: tpu_custom_call.1
$region0: #{tpu_custom_call.1}
  #allocation0 [shape = 'u32[]', space=smem, size = 0x4, offset = 0x4, fixed_abs, tag = 'smem constant byte address 0x4 - core index']
  #allocation1 [shape = 'u32[72,128]{1,0:T(1,128)}', space=vmem, size = 0x9000, scoped, tag = 'internal scratch']
  #allocation2 [shape = 'f32[8,512]{1,0:T(8,128)}', space=vmem, size = 0x4000, scoped, tag = 'scratch operand']
  #allocation3 [shape = 'f32[1,128]{1,0:T(1,128)}', space=vmem, size = 0x200, scoped, tag = 'scratch operand']
  #allocation4 [shape = 'f32[1,128]{1,0:T(1,128)}', space=vmem, size = 0x200, scoped, tag = 'scratch operand']
  %s0 = inlined_call_operand.hbm [shape: bf16[8,16], index: 0, kind: input, shape index: {}]
  %s1 = inlined_call_operand.hbm [shape: bf16[16,512], index: 1, kind: input, shape index: {}]
  %s2 = inlined_call_operand.hbm [shape: bf16[128,512], index: 2, kind: input, shape index: {}]
  %s3 = inlined_call_operand.hbm [shape: f32[1,512], index: 3, kind: input, shape index: {}]
  %s4 = inlined_call_operand.hbm [shape: f32[8,128], index: 4, kind: output, shape index: {}]
  %s5 = sld [smem:[#allocation0]]
  $region46: #{tpu_custom_call.1} parent=0
    _
  %s7 = ssub.s32 1, %s5
  %s8 = scalar_select 0, %s7, %s5
  $region1: #{tpu_custom_call.1} parent=0
    #allocation5 [shape = 'u8[2048]{0}', space=vmem, size = 0x800, scoped, tag = 'input window, operand 0, single buffered']
    #allocation6 [shape = 's32[1]{0}', space=sflag, size = 0x4, scoped, tag = 'scoped memory for tpu_custom_call.1']
    #allocation7 [shape = 's32[1]{0}', space=sflag, size = 0x4, scoped, tag = 'scoped memory for tpu_custom_call.1']
    #allocation8 [shape = 'u8[16384]{0}', space=vmem, size = 0x4000, scoped, tag = 'input window, operand 1, single buffered']
    #allocation9 [shape = 's32[1]{0}', space=sflag, size = 0x4, scoped, tag = 'scoped memory for tpu_custom_call.1']
    #allocation10 [shape = 'u8[131072]{0}', space=vmem, size = 0x20000, scoped, tag = 'input window, operand 2, single buffered']
    #allocation11 [shape = 'u8[2048]{0}', space=vmem, size = 0x800, scoped, tag = 'input window, operand 3, single buffered']
    #allocation12 [shape = 's32[1]{0}', space=sflag, size = 0x4, scoped, tag = 'scoped memory for tpu_custom_call.1']
    #allocation13 [shape = 'u8[4096]{0}', space=vmem, size = 0x1000, scoped, tag = 'output window, operand 0, single buffered']
    %9 = vsyncpa [#allocation6], 0
    %10 = vsyncpa [#allocation9], 0
    %11 = vsyncpa [#allocation12], 0
    %12 = vsyncpa [#allocation7], 0
    // Predicated region
    $region2: #{tpu_custom_call.1} parent=1 // pred_check
      _
    $region3: #{tpu_custom_call.1} parent=1 // pred_check_branch
      %14 = sbr.rel (0) target = $region5
    $region4: #{tpu_custom_call.1} parent=1 // pred_region
      %16 = vsyncadd [#allocation6], 0
      %s18 = sshll.u32 %s0, 4
      %s19 = int_to_ptr.hbm [resolvable:$true] %s18
      %s20 = sshll.u32 [#allocation5], 4
      %s21 = int_to_ptr.vmem [resolvable:$true] %s20
      %23 = dma.hbm_to_vmem [thread:$0]  %s19, 64, %s21, [#allocation6]
    $region5: #{tpu_custom_call.1} parent=1 // pred_fallthru
      _
    // Predicated region
    $region6: #{tpu_custom_call.1} parent=1 // pred_check
      _
    $region7: #{tpu_custom_call.1} parent=1 // pred_check_branch
      %25 = sbr.rel (0) target = $region9
    $region8: #{tpu_custom_call.1} parent=1 // pred_region
      %27 = vsyncadd [#allocation9], 0
      %s28 = sshll.u32 %s1, 4
      %s29 = int_to_ptr.hbm [resolvable:$true] %s28
      %s30 = sshll.u32 [#allocation8], 4
      %s31 = int_to_ptr.vmem [resolvable:$true] %s30
      %36 = dma.hbm_to_vmem [thread:$0]  %s29, 512, %s31, [#allocation9], 256, 256, 16
    $region9: #{tpu_custom_call.1} parent=1 // pred_fallthru
      _
    // Predicated region
    $region10: #{tpu_custom_call.1} parent=1 // pred_check
      _
    $region11: #{tpu_custom_call.1} parent=1 // pred_check_branch
      %38 = sbr.rel (0) target = $region13
    $region12: #{tpu_custom_call.1} parent=1 // pred_region
      %40 = vsyncadd [#allocation9], 0
      %s41 = sshll.u32 %s2, 4
      %s42 = int_to_ptr.hbm [resolvable:$true] %s41
      %s43 = sshll.u32 [#allocation10], 4
      %s44 = int_to_ptr.vmem [resolvable:$true] %s43
      %49 = dma.hbm_to_vmem [thread:$0]  %s42, 4096, %s44, [#allocation9], 256, 256, 16
    $region13: #{tpu_custom_call.1} parent=1 // pred_fallthru
      _
    // Predicated region
    $region14: #{tpu_custom_call.1} parent=1 // pred_check
      _
    $region15: #{tpu_custom_call.1} parent=1 // pred_check_branch
      %51 = sbr.rel (0) target = $region17
    $region16: #{tpu_custom_call.1} parent=1 // pred_region
      %53 = vsyncadd [#allocation12], 0
      %s55 = sshll.u32 %s3, 4
      %s56 = int_to_ptr.hbm [resolvable:$true] %s55
      %s57 = sshll.u32 [#allocation11], 4
      %s58 = int_to_ptr.vmem [resolvable:$true] %s57
      %60 = dma.hbm_to_vmem [thread:$0]  %s56, 64, %s58, [#allocation12]
    $region17: #{tpu_custom_call.1} parent=1 // pred_fallthru
      _
    // Predicated region
    $region18: #{tpu_custom_call.1} parent=1 // pred_check
      _
    $region19: #{tpu_custom_call.1} parent=1 // pred_check_branch
      %62 = sbr.rel (0) target = $region21
    $region20: #{tpu_custom_call.1} parent=1 // pred_region
      %64 = dma.done [#allocation6], 64
    $region21: #{tpu_custom_call.1} parent=1 // pred_fallthru
      _
    // Predicated region
    $region22: #{tpu_custom_call.1} parent=1 // pred_check
      _
    $region23: #{tpu_custom_call.1} parent=1 // pred_check_branch
      %66 = sbr.rel (0) target = $region25
    $region24: #{tpu_custom_call.1} parent=1 // pred_region
      %68 = dma.done [#allocation9], 512
    $region25: #{tpu_custom_call.1} parent=1 // pred_fallthru
      _
    // Predicated region
    $region26: #{tpu_custom_call.1} parent=1 // pred_check
      _
    $region27: #{tpu_custom_call.1} parent=1 // pred_check_branch
      %70 = sbr.rel (0) target = $region29
    $region28: #{tpu_custom_call.1} parent=1 // pred_region
      %72 = dma.done [#allocation9], 4096
    $region29: #{tpu_custom_call.1} parent=1 // pred_fallthru
      _
    // Predicated region
    $region30: #{tpu_custom_call.1} parent=1 // pred_check
      _
    $region31: #{tpu_custom_call.1} parent=1 // pred_check_branch
      %74 = sbr.rel (0) target = $region33
    $region32: #{tpu_custom_call.1} parent=1 // pred_region
      %76 = dma.done [#allocation12], 64
    $region33: #{tpu_custom_call.1} parent=1 // pred_fallthru
      _
    %p78 = scmp.eq.s32.totalorder 0, 0
    // Predicated region
    $region34: #{tpu_custom_call.1} parent=1 // pred_check
      %p79 = pneg %p78
    $region35: #{tpu_custom_call.1} parent=1 // pred_check_branch
      %81 = sbr.rel (%p79) target = $region37
    $region36: #{tpu_custom_call.1} parent=1 // pred_region
      %82 = vst [vmem:[#allocation3] sm:$0x1] 0.0
      %83 = vst [vmem:[#allocation4] sm:$0x1] 0.0
    $region37: #{tpu_custom_call.1} parent=1 // pred_fallthru
      _
    %v84 = vld [vmem:[#allocation5] sm:$0xf]
    %v85 = vld [vmem:[#allocation8] sm:$0xff]
    %v86 = vld [vmem:[#allocation8 + $0x8] sm:$0xff]
    %v87 = vld [vmem:[#allocation8 + $0x10] sm:$0xff]
    %v88 = vld [vmem:[#allocation8 + $0x18] sm:$0xff]
    %v89 = vld [vmem:[#allocation11] sm:$0xf]
    %v91 = vperm.slane %v89, 0
    %v92 = vperm.slane %v89, 1
    %v93 = vperm.slane %v89, 2
    %v94 = vperm.slane %v89, 3
    %v103 = vunpack.c.l.b16 %v85
    %v104 = vunpack.c.h.b16 %v85
    %v105 = vunpack.c.l.b16 %v86
    %v106 = vunpack.c.h.b16 %v86
    %v107 = vunpack.c.l.b16 %v87
    %v108 = vunpack.c.h.b16 %v87
    %v109 = vunpack.c.l.b16 %v88
    %v110 = vunpack.c.h.b16 %v88
    %v111 = vpack.c.b16 %v107, %v103
    %v112 = vpack.c.b16 %v108, %v104
    %v113 = vpack.c.b16 %v109, %v105
    %v114 = vpack.c.b16 %v110, %v106
    %vm119 = vcmask 130048
    %v121 = vsel %vm119, %v84, 0
    %123 = vmatpush.bf16.msra.mxu0 0
    %124 = vmatpush.bf16.msra.mxu0 0
    %125 = vmatpush.bf16.msra.mxu0 0
    %126 = vmatpush.bf16.msra.mxu0 0
    %127 = vmatpush.bf16.msra.mxu0 0
    %128 = vmatpush.bf16.msra.mxu0 0
    %129 = vmatpush.bf16.msra.mxu0 0
    %130 = vmatpush.bf16.msra.mxu0 %v111
    %131 = vmatmul.bf16.gmra.mxu0 %v121
    %v132 = vpop.f32.mrf.mxu0
    %v133 = vadd.f32 %v91, %v132
    %v134 = vpop.f32.mrf.mxu0
    %135 = vdwg.mxu0
    %136 = vmatpush.bf16.msra.mxu0 0
    %137 = vmatpush.bf16.msra.mxu0 0
    %138 = vmatpush.bf16.msra.mxu0 0
    %139 = vmatpush.bf16.msra.mxu0 0
    %140 = vmatpush.bf16.msra.mxu0 0
    %141 = vmatpush.bf16.msra.mxu0 0
    %142 = vmatpush.bf16.msra.mxu0 0
    %143 = vmatpush.bf16.msra.mxu0 %v112
    %144 = vmatmul.bf16.gmra.mxu0 %v121
    %v145 = vpop.f32.mrf.mxu0
    %v146 = vadd.f32 %v92, %v145
    %v147 = vpop.f32.mrf.mxu0
    %148 = vdwg.mxu0
    %149 = vmatpush.bf16.msra.mxu0 0
    %150 = vmatpush.bf16.msra.mxu0 0
    %151 = vmatpush.bf16.msra.mxu0 0
    %152 = vmatpush.bf16.msra.mxu0 0
    %153 = vmatpush.bf16.msra.mxu0 0
    %154 = vmatpush.bf16.msra.mxu0 0
    %155 = vmatpush.bf16.msra.mxu0 0
    %156 = vmatpush.bf16.msra.mxu0 %v113
    %157 = vmatmul.bf16.gmra.mxu0 %v121
    %v158 = vpop.f32.mrf.mxu0
    %v159 = vadd.f32 %v93, %v158
    %v160 = vpop.f32.mrf.mxu0
    %161 = vdwg.mxu0
    %162 = vmatpush.bf16.msra.mxu0 0
    %163 = vmatpush.bf16.msra.mxu0 0
    %164 = vmatpush.bf16.msra.mxu0 0
    %165 = vmatpush.bf16.msra.mxu0 0
    %166 = vmatpush.bf16.msra.mxu0 0
    %167 = vmatpush.bf16.msra.mxu0 0
    %168 = vmatpush.bf16.msra.mxu0 0
    %169 = vmatpush.bf16.msra.mxu0 %v114
    %170 = vmatmul.bf16.gmra.mxu0 %v121
    %v171 = vpop.f32.mrf.mxu0
    %v172 = vadd.f32 %v94, %v171
    %v173 = vpop.f32.mrf.mxu0
    %174 = vdwg.mxu0
    %175 = vst [vmem:[#allocation2] sm:$0xff] %v133
    %176 = vst [vmem:[#allocation2 + $0x8] sm:$0xff] %v146
    %177 = vst [vmem:[#allocation2 + $0x10] sm:$0xff] %v159
    %178 = vst [vmem:[#allocation2 + $0x18] sm:$0xff] %v172
    %v179 = vld [vmem:[#allocation10] sm:$0xff]
    %v180 = vld [vmem:[#allocation10 + $0x8] sm:$0xff]
    %v181 = vld [vmem:[#allocation10 + $0x10] sm:$0xff]
    %v182 = vld [vmem:[#allocation10 + $0x18] sm:$0xff]
    %v183 = vld [vmem:[#allocation10 + $0x20] sm:$0xff]
    %v184 = vld [vmem:[#allocation10 + $0x28] sm:$0xff]
    %v185 = vld [vmem:[#allocation10 + $0x30] sm:$0xff]
    %v186 = vld [vmem:[#allocation10 + $0x38] sm:$0xff]
    %v187 = vld [vmem:[#allocation10 + $0x40] sm:$0xff]
    %v188 = vld [vmem:[#allocation10 + $0x48] sm:$0xff]
    %v189 = vld [vmem:[#allocation10 + $0x50] sm:$0xff]
    %v190 = vld [vmem:[#allocation10 + $0x58] sm:$0xff]
    %v191 = vld [vmem:[#allocation10 + $0x60] sm:$0xff]
    %v192 = vld [vmem:[#allocation10 + $0x68] sm:$0xff]
    %v193 = vld [vmem:[#allocation10 + $0x70] sm:$0xff]
    %v194 = vld [vmem:[#allocation10 + $0x78] sm:$0xff]
    %v195 = vld [vmem:[#allocation10 + $0x80] sm:$0xff]
    %v196 = vld [vmem:[#allocation10 + $0x88] sm:$0xff]
    %v197 = vld [vmem:[#allocation10 + $0x90] sm:$0xff]
    %v198 = vld [vmem:[#allocation10 + $0x98] sm:$0xff]
    %v199 = vld [vmem:[#allocation10 + $0xa0] sm:$0xff]
    %v200 = vld [vmem:[#allocation10 + $0xa8] sm:$0xff]
    %v201 = vld [vmem:[#allocation10 + $0xb0] sm:$0xff]
    %v202 = vld [vmem:[#allocation10 + $0xb8] sm:$0xff]
    %v203 = vld [vmem:[#allocation10 + $0xc0] sm:$0xff]
    %v204 = vld [vmem:[#allocation10 + $0xc8] sm:$0xff]
    %v205 = vld [vmem:[#allocation10 + $0xd0] sm:$0xff]
    %v206 = vld [vmem:[#allocation10 + $0xd8] sm:$0xff]
    %v207 = vld [vmem:[#allocation10 + $0xe0] sm:$0xff]
    %v208 = vld [vmem:[#allocation10 + $0xe8] sm:$0xff]
    %v209 = vld [vmem:[#allocation10 + $0xf0] sm:$0xff]
    %v210 = vld [vmem:[#allocation10 + $0xf8] sm:$0xff]
    %v211 = vld [vmem:[#allocation3] sm:$0x1]
    %v212 = vld [vmem:[#allocation4] sm:$0x1]
    %v213 = vld [vmem:[#allocation2] ss:$8 sm:$0xf]
    %v214 = vpack.c.bf16 %v211, %v211
    %v247 = vunpack.c.l.b16 %v179
    %v248 = vunpack.c.h.b16 %v179
    %v249 = vunpack.c.l.b16 %v180
    %v250 = vunpack.c.h.b16 %v180
    %v251 = vunpack.c.l.b16 %v181
    %v252 = vunpack.c.h.b16 %v181
    %v253 = vunpack.c.l.b16 %v182
    %v254 = vunpack.c.h.b16 %v182
    %v255 = vunpack.c.l.b16 %v183
    %v256 = vunpack.c.h.b16 %v183
    %v257 = vunpack.c.l.b16 %v184
    %v258 = vunpack.c.h.b16 %v184
    %v259 = vunpack.c.l.b16 %v185
    %v260 = vunpack.c.h.b16 %v185
    %v261 = vunpack.c.l.b16 %v186
    %v262 = vunpack.c.h.b16 %v186
    %v263 = vunpack.c.l.b16 %v187
    %v264 = vunpack.c.h.b16 %v187
    %v265 = vunpack.c.l.b16 %v188
    %v266 = vunpack.c.h.b16 %v188
    %v267 = vunpack.c.l.b16 %v189
    %v268 = vunpack.c.h.b16 %v189
    %v269 = vunpack.c.l.b16 %v190
    %v270 = vunpack.c.h.b16 %v190
    %v271 = vunpack.c.l.b16 %v191
    %v272 = vunpack.c.h.b16 %v191
    %v273 = vunpack.c.l.b16 %v192
    %v274 = vunpack.c.h.b16 %v192
    %v275 = vunpack.c.l.b16 %v193
    %v276 = vunpack.c.h.b16 %v193
    %v277 = vunpack.c.l.b16 %v194
    %v278 = vunpack.c.h.b16 %v194
    %v279 = vunpack.c.l.b16 %v195
    %v280 = vunpack.c.h.b16 %v195
    %v281 = vunpack.c.l.b16 %v196
    %v282 = vunpack.c.h.b16 %v196
    %v283 = vunpack.c.l.b16 %v197
    %v284 = vunpack.c.h.b16 %v197
    %v285 = vunpack.c.l.b16 %v198
    %v286 = vunpack.c.h.b16 %v198
    %v287 = vunpack.c.l.b16 %v199
    %v288 = vunpack.c.h.b16 %v199
    %v289 = vunpack.c.l.b16 %v200
    %v290 = vunpack.c.h.b16 %v200
    %v291 = vunpack.c.l.b16 %v201
    %v292 = vunpack.c.h.b16 %v201
    %v293 = vunpack.c.l.b16 %v202
    %v294 = vunpack.c.h.b16 %v202
    %v295 = vunpack.c.l.b16 %v203
    %v296 = vunpack.c.h.b16 %v203
    %v297 = vunpack.c.l.b16 %v204
    %v298 = vunpack.c.h.b16 %v204
    %v299 = vunpack.c.l.b16 %v205
    %v300 = vunpack.c.h.b16 %v205
    %v301 = vunpack.c.l.b16 %v206
    %v302 = vunpack.c.h.b16 %v206
    %v303 = vunpack.c.l.b16 %v207
    %v304 = vunpack.c.h.b16 %v207
    %v305 = vunpack.c.l.b16 %v208
    %v306 = vunpack.c.h.b16 %v208
    %v307 = vunpack.c.l.b16 %v209
    %v308 = vunpack.c.h.b16 %v209
    %v309 = vunpack.c.l.b16 %v210
    %v310 = vunpack.c.h.b16 %v210
    %v311 = vpack.c.b16 %v251, %v247
    %v312 = vpack.c.b16 %v252, %v248
    %v313 = vpack.c.b16 %v253, %v249
    %v314 = vpack.c.b16 %v254, %v250
    %v315 = vpack.c.b16 %v259, %v255
    %v316 = vpack.c.b16 %v260, %v256
    %v317 = vpack.c.b16 %v261, %v257
    %v318 = vpack.c.b16 %v262, %v258
    %v319 = vpack.c.b16 %v267, %v263
    %v320 = vpack.c.b16 %v268, %v264
    %v321 = vpack.c.b16 %v269, %v265
    %v322 = vpack.c.b16 %v270, %v266
    %v323 = vpack.c.b16 %v275, %v271
    %v324 = vpack.c.b16 %v276, %v272
    %v325 = vpack.c.b16 %v277, %v273
    %v326 = vpack.c.b16 %v278, %v274
    %v327 = vpack.c.b16 %v283, %v279
    %v328 = vpack.c.b16 %v284, %v280
    %v329 = vpack.c.b16 %v285, %v281
    %v330 = vpack.c.b16 %v286, %v282
    %v331 = vpack.c.b16 %v291, %v287
    %v332 = vpack.c.b16 %v292, %v288
    %v333 = vpack.c.b16 %v293, %v289
    %v334 = vpack.c.b16 %v294, %v290
    %v335 = vpack.c.b16 %v299, %v295
    %v336 = vpack.c.b16 %v300, %v296
    %v337 = vpack.c.b16 %v301, %v297
    %v338 = vpack.c.b16 %v302, %v298
    %v339 = vpack.c.b16 %v307, %v303
    %v340 = vpack.c.b16 %v308, %v304
    %v341 = vpack.c.b16 %v309, %v305
    %v342 = vpack.c.b16 %v310, %v306
    %375 = vmatpush.bf16.msra.mxu0 %v339
    %376 = vmatpush.bf16.msra.mxu0 %v335
    %377 = vmatpush.bf16.msra.mxu0 %v331
    %378 = vmatpush.bf16.msra.mxu0 %v327
    %379 = vmatpush.bf16.msra.mxu0 %v323
    %380 = vmatpush.bf16.msra.mxu0 %v319
    %381 = vmatpush.bf16.msra.mxu0 %v315
    %382 = vmatpush.bf16.msra.mxu0 %v311
    %383 = vmatmul.bf16.gmra.mxu0 %v214
    %v384 = vpop.f32.mrf.mxu0
    %v385 = vadd.f32 0.0, %v384
    %v386 = vpop.f32.mrf.mxu0
    %387 = vdwg.mxu0
    %388 = vmatpush.bf16.msra.mxu0 %v340
    %389 = vmatpush.bf16.msra.mxu0 %v336
    %390 = vmatpush.bf16.msra.mxu0 %v332
    %391 = vmatpush.bf16.msra.mxu0 %v328
    %392 = vmatpush.bf16.msra.mxu0 %v324
    %393 = vmatpush.bf16.msra.mxu0 %v320
    %394 = vmatpush.bf16.msra.mxu0 %v316
    %395 = vmatpush.bf16.msra.mxu0 %v312
    %396 = vmatmul.bf16.gmra.mxu0 %v214
    %v397 = vpop.f32.mrf.mxu0
    %v398 = vadd.f32 0.0, %v397
    %v399 = vpop.f32.mrf.mxu0
    %400 = vdwg.mxu0
    %401 = vmatpush.bf16.msra.mxu0 %v341
    %402 = vmatpush.bf16.msra.mxu0 %v337
    %403 = vmatpush.bf16.msra.mxu0 %v333
    %404 = vmatpush.bf16.msra.mxu0 %v329
    %405 = vmatpush.bf16.msra.mxu0 %v325
    %406 = vmatpush.bf16.msra.mxu0 %v321
    %407 = vmatpush.bf16.msra.mxu0 %v317
    %408 = vmatpush.bf16.msra.mxu0 %v313
    %409 = vmatmul.bf16.gmra.mxu0 %v214
    %v410 = vpop.f32.mrf.mxu0
    %v411 = vadd.f32 0.0, %v410
    %v412 = vpop.f32.mrf.mxu0
    %413 = vdwg.mxu0
    %414 = vmatpush.bf16.msra.mxu0 %v342
    %415 = vmatpush.bf16.msra.mxu0 %v338
    %416 = vmatpush.bf16.msra.mxu0 %v334
    %417 = vmatpush.bf16.msra.mxu0 %v330
    %418 = vmatpush.bf16.msra.mxu0 %v326
    %419 = vmatpush.bf16.msra.mxu0 %v322
    %420 = vmatpush.bf16.msra.mxu0 %v318
    %421 = vmatpush.bf16.msra.mxu0 %v314
    %422 = vmatmul.bf16.gmra.mxu0 %v214
    %v423 = vpop.f32.mrf.mxu0
    %v424 = vadd.f32 0.0, %v423
    %v425 = vpop.f32.mrf.mxu0
    %426 = vdwg.mxu0
    %v431 = vrot.slane %v398, 7
    %v432 = vrot.slane %v411, 6
    %v433 = vrot.slane %v424, 5
    %vm434 = vcmask 1040384
    %v435 = vsel %vm434, %v385, %v431
    %vm436 = vcmask 1042434
    %v437 = vsel %vm436, %v432, %v433
    %vm438 = vcmask 1041408
    %v439 = vsel %vm438, %v435, %v437
    %v441 = vadd.f32 %v213, %v439
    %v442 = vxor.u32 %v441, 2147483648
    %v443 = vmul.f32 %v442, 1.442695
    %v444 = vpow.pop %v443
    %v445 = vadd.f32 %v444, 1.0
    %v446 = vrcp.pop %v445
    %v447 = vmul.f32 %v445, %v446
    %v448 = vsub.f32 1.0, %v447
    %v449 = vmul.f32 %v446, %v448
    %v450 = vadd.f32 %v446, %v449
    %vm451 = vweird.f32 %v445
    %vm452 = vweird.f32 %v446
    %vm453 = vmor %vm451, %vm452
    %v454 = vsel %vm453, %v446, %v450
    %v455 = vand.u32 2147483647, %v445
    %vm456 = vcmp.eq.f32.partialorder %v455, 8.507059e+37
    %v457 = vand.u32 %v445, 2147483648
    %v458 = vor.u32 1.1754944e-38, %v457
    %v459 = vsel %vm456, %v458, %v454
    %v460 = vmul.f32 1.0, %v459
    %v462 = vrot.slane %v441, 3
    %v464 = vtanh.pop %v462
    %v466 = vrot.slane %v460, 1
    %v468 = vmul.f32 %v466, %v212
    %v469 = vmul.f32 %v460, %v464
    %v470 = vadd.f32 %v468, %v469
    %v471 = vtanh.pop %v470
    %v472 = vrot.slane %v460, 2
    %v474 = vmul.f32 %v472, %v471
    %s475 = scalar_lea.vmem [#allocation2], 1
    %v476 = vld [vmem:[%s475] ss:$8 sm:$0xf]
    %v477 = vpack.c.bf16 %v474, %v474
    %478 = vmatpush.bf16.msra.mxu0 %v339
    %479 = vmatpush.bf16.msra.mxu0 %v335
    %480 = vmatpush.bf16.msra.mxu0 %v331
    %481 = vmatpush.bf16.msra.mxu0 %v327
    %482 = vmatpush.bf16.msra.mxu0 %v323
    %483 = vmatpush.bf16.msra.mxu0 %v319
    %484 = vmatpush.bf16.msra.mxu0 %v315
    %485 = vmatpush.bf16.msra.mxu0 %v311
    %486 = vmatmul.bf16.gmra.mxu0 %v477
    %v487 = vpop.f32.mrf.mxu0
    %v488 = vadd.f32 0.0, %v487
    %v489 = vpop.f32.mrf.mxu0
    %490 = vdwg.mxu0
    %491 = vmatpush.bf16.msra.mxu0 %v340
    %492 = vmatpush.bf16.msra.mxu0 %v336
    %493 = vmatpush.bf16.msra.mxu0 %v332
    %494 = vmatpush.bf16.msra.mxu0 %v328
    %495 = vmatpush.bf16.msra.mxu0 %v324
    %496 = vmatpush.bf16.msra.mxu0 %v320
    %497 = vmatpush.bf16.msra.mxu0 %v316
    %498 = vmatpush.bf16.msra.mxu0 %v312
    %499 = vmatmul.bf16.gmra.mxu0 %v477
    %v500 = vpop.f32.mrf.mxu0
    %v501 = vadd.f32 0.0, %v500
    %v502 = vpop.f32.mrf.mxu0
    %503 = vdwg.mxu0
    %504 = vmatpush.bf16.msra.mxu0 %v341
    %505 = vmatpush.bf16.msra.mxu0 %v337
    %506 = vmatpush.bf16.msra.mxu0 %v333
    %507 = vmatpush.bf16.msra.mxu0 %v329
    %508 = vmatpush.bf16.msra.mxu0 %v325
    %509 = vmatpush.bf16.msra.mxu0 %v321
    %510 = vmatpush.bf16.msra.mxu0 %v317
    %511 = vmatpush.bf16.msra.mxu0 %v313
    %512 = vmatmul.bf16.gmra.mxu0 %v477
    %v513 = vpop.f32.mrf.mxu0
    %v514 = vadd.f32 0.0, %v513
    %v515 = vpop.f32.mrf.mxu0
    %516 = vdwg.mxu0
    %517 = vmatpush.bf16.msra.mxu0 %v342
    %518 = vmatpush.bf16.msra.mxu0 %v338
    %519 = vmatpush.bf16.msra.mxu0 %v334
    %520 = vmatpush.bf16.msra.mxu0 %v330
    %521 = vmatpush.bf16.msra.mxu0 %v326
    %522 = vmatpush.bf16.msra.mxu0 %v322
    %523 = vmatpush.bf16.msra.mxu0 %v318
    %524 = vmatpush.bf16.msra.mxu0 %v314
    %525 = vmatmul.bf16.gmra.mxu0 %v477
    %v526 = vpop.f32.mrf.mxu0
    %v527 = vadd.f32 0.0, %v526
    %v528 = vpop.f32.mrf.mxu0
    %529 = vdwg.mxu0
    %v534 = vrot.slane %v501, 7
    %v535 = vrot.slane %v514, 6
    %v536 = vrot.slane %v527, 5
    %v537 = vsel %vm434, %v488, %v534
    %v538 = vsel %vm436, %v535, %v536
    %v539 = vsel %vm438, %v537, %v538
    %v541 = vadd.f32 %v476, %v539
    %v542 = vxor.u32 %v541, 2147483648
    %v543 = vmul.f32 %v542, 1.442695
    %v544 = vpow.pop %v543
    %v545 = vadd.f32 %v544, 1.0
    %v546 = vrcp.pop %v545
    %v547 = vmul.f32 %v545, %v546
    %v548 = vsub.f32 1.0, %v547
    %v549 = vmul.f32 %v546, %v548
    %v550 = vadd.f32 %v546, %v549
    %vm551 = vweird.f32 %v545
    %vm552 = vweird.f32 %v546
    %vm553 = vmor %vm551, %vm552
    %v554 = vsel %vm553, %v546, %v550
    %v555 = vand.u32 2147483647, %v545
    %vm556 = vcmp.eq.f32.partialorder %v555, 8.507059e+37
    %v557 = vand.u32 %v545, 2147483648
    %v558 = vor.u32 1.1754944e-38, %v557
    %v559 = vsel %vm556, %v558, %v554
    %v560 = vmul.f32 1.0, %v559
    %v562 = vrot.slane %v541, 3
    %v564 = vtanh.pop %v562
    %v566 = vrot.slane %v560, 1
    %v568 = vmul.f32 %v566, %v470
    %v569 = vmul.f32 %v560, %v564
    %v570 = vadd.f32 %v568, %v569
    %v571 = vtanh.pop %v570
    %v572 = vrot.slane %v560, 2
    %v574 = vmul.f32 %v572, %v571
    %s575 = scalar_lea.vmem [#allocation2], 2
    %v576 = vld [vmem:[%s575] ss:$8 sm:$0xf]
    %v577 = vpack.c.bf16 %v574, %v574
    %578 = vmatpush.bf16.msra.mxu0 %v339
    %579 = vmatpush.bf16.msra.mxu0 %v335
    %580 = vmatpush.bf16.msra.mxu0 %v331
    %581 = vmatpush.bf16.msra.mxu0 %v327
    %582 = vmatpush.bf16.msra.mxu0 %v323
    %583 = vmatpush.bf16.msra.mxu0 %v319
    %584 = vmatpush.bf16.msra.mxu0 %v315
    %585 = vmatpush.bf16.msra.mxu0 %v311
    %586 = vmatmul.bf16.gmra.mxu0 %v577
    %v587 = vpop.f32.mrf.mxu0
    %v588 = vadd.f32 0.0, %v587
    %v589 = vpop.f32.mrf.mxu0
    %590 = vdwg.mxu0
    %591 = vmatpush.bf16.msra.mxu0 %v340
    %592 = vmatpush.bf16.msra.mxu0 %v336
    %593 = vmatpush.bf16.msra.mxu0 %v332
    %594 = vmatpush.bf16.msra.mxu0 %v328
    %595 = vmatpush.bf16.msra.mxu0 %v324
    %596 = vmatpush.bf16.msra.mxu0 %v320
    %597 = vmatpush.bf16.msra.mxu0 %v316
    %598 = vmatpush.bf16.msra.mxu0 %v312
    %599 = vmatmul.bf16.gmra.mxu0 %v577
    %v600 = vpop.f32.mrf.mxu0
    %v601 = vadd.f32 0.0, %v600
    %v602 = vpop.f32.mrf.mxu0
    %603 = vdwg.mxu0
    %604 = vmatpush.bf16.msra.mxu0 %v341
    %605 = vmatpush.bf16.msra.mxu0 %v337
    %606 = vmatpush.bf16.msra.mxu0 %v333
    %607 = vmatpush.bf16.msra.mxu0 %v329
    %608 = vmatpush.bf16.msra.mxu0 %v325
    %609 = vmatpush.bf16.msra.mxu0 %v321
    %610 = vmatpush.bf16.msra.mxu0 %v317
    %611 = vmatpush.bf16.msra.mxu0 %v313
    %612 = vmatmul.bf16.gmra.mxu0 %v577
    %v613 = vpop.f32.mrf.mxu0
    %v614 = vadd.f32 0.0, %v613
    %v615 = vpop.f32.mrf.mxu0
    %616 = vdwg.mxu0
    %617 = vmatpush.bf16.msra.mxu0 %v342
    %618 = vmatpush.bf16.msra.mxu0 %v338
    %619 = vmatpush.bf16.msra.mxu0 %v334
    %620 = vmatpush.bf16.msra.mxu0 %v330
    %621 = vmatpush.bf16.msra.mxu0 %v326
    %622 = vmatpush.bf16.msra.mxu0 %v322
    %623 = vmatpush.bf16.msra.mxu0 %v318
    %624 = vmatpush.bf16.msra.mxu0 %v314
    %625 = vmatmul.bf16.gmra.mxu0 %v577
    %v626 = vpop.f32.mrf.mxu0
    %v627 = vadd.f32 0.0, %v626
    %v628 = vpop.f32.mrf.mxu0
    %629 = vdwg.mxu0
    %v634 = vrot.slane %v601, 7
    %v635 = vrot.slane %v614, 6
    %v636 = vrot.slane %v627, 5
    %v637 = vsel %vm434, %v588, %v634
    %v638 = vsel %vm436, %v635, %v636
    %v639 = vsel %vm438, %v637, %v638
    %v641 = vadd.f32 %v576, %v639
    %v642 = vxor.u32 %v641, 2147483648
    %v643 = vmul.f32 %v642, 1.442695
    %v644 = vpow.pop %v643
    %v645 = vadd.f32 %v644, 1.0
    %v646 = vrcp.pop %v645
    %v647 = vmul.f32 %v645, %v646
    %v648 = vsub.f32 1.0, %v647
    %v649 = vmul.f32 %v646, %v648
    %v650 = vadd.f32 %v646, %v649
    %vm651 = vweird.f32 %v645
    %vm652 = vweird.f32 %v646
    %vm653 = vmor %vm651, %vm652
    %v654 = vsel %vm653, %v646, %v650
    %v655 = vand.u32 2147483647, %v645
    %vm656 = vcmp.eq.f32.partialorder %v655, 8.507059e+37
    %v657 = vand.u32 %v645, 2147483648
    %v658 = vor.u32 1.1754944e-38, %v657
    %v659 = vsel %vm656, %v658, %v654
    %v660 = vmul.f32 1.0, %v659
    %v662 = vrot.slane %v641, 3
    %v664 = vtanh.pop %v662
    %v666 = vrot.slane %v660, 1
    %v668 = vmul.f32 %v666, %v570
    %v669 = vmul.f32 %v660, %v664
    %v670 = vadd.f32 %v668, %v669
    %v671 = vtanh.pop %v670
    %v672 = vrot.slane %v660, 2
    %v674 = vmul.f32 %v672, %v671
    %s675 = scalar_lea.vmem [#allocation2], 3
    %v676 = vld [vmem:[%s675] ss:$8 sm:$0xf]
    %v677 = vpack.c.bf16 %v674, %v674
    %678 = vmatpush.bf16.msra.mxu0 %v339
    %679 = vmatpush.bf16.msra.mxu0 %v335
    %680 = vmatpush.bf16.msra.mxu0 %v331
    %681 = vmatpush.bf16.msra.mxu0 %v327
    %682 = vmatpush.bf16.msra.mxu0 %v323
    %683 = vmatpush.bf16.msra.mxu0 %v319
    %684 = vmatpush.bf16.msra.mxu0 %v315
    %685 = vmatpush.bf16.msra.mxu0 %v311
    %686 = vmatmul.bf16.gmra.mxu0 %v677
    %v687 = vpop.f32.mrf.mxu0
    %v688 = vadd.f32 0.0, %v687
    %v689 = vpop.f32.mrf.mxu0
    %690 = vdwg.mxu0
    %691 = vmatpush.bf16.msra.mxu0 %v340
    %692 = vmatpush.bf16.msra.mxu0 %v336
    %693 = vmatpush.bf16.msra.mxu0 %v332
    %694 = vmatpush.bf16.msra.mxu0 %v328
    %695 = vmatpush.bf16.msra.mxu0 %v324
    %696 = vmatpush.bf16.msra.mxu0 %v320
    %697 = vmatpush.bf16.msra.mxu0 %v316
    %698 = vmatpush.bf16.msra.mxu0 %v312
    %699 = vmatmul.bf16.gmra.mxu0 %v677
    %v700 = vpop.f32.mrf.mxu0
    %v701 = vadd.f32 0.0, %v700
    %v702 = vpop.f32.mrf.mxu0
    %703 = vdwg.mxu0
    %704 = vmatpush.bf16.msra.mxu0 %v341
    %705 = vmatpush.bf16.msra.mxu0 %v337
    %706 = vmatpush.bf16.msra.mxu0 %v333
    %707 = vmatpush.bf16.msra.mxu0 %v329
    %708 = vmatpush.bf16.msra.mxu0 %v325
    %709 = vmatpush.bf16.msra.mxu0 %v321
    %710 = vmatpush.bf16.msra.mxu0 %v317
    %711 = vmatpush.bf16.msra.mxu0 %v313
    %712 = vmatmul.bf16.gmra.mxu0 %v677
    %v713 = vpop.f32.mrf.mxu0
    %v714 = vadd.f32 0.0, %v713
    %v715 = vpop.f32.mrf.mxu0
    %716 = vdwg.mxu0
    %717 = vmatpush.bf16.msra.mxu0 %v342
    %718 = vmatpush.bf16.msra.mxu0 %v338
    %719 = vmatpush.bf16.msra.mxu0 %v334
    %720 = vmatpush.bf16.msra.mxu0 %v330
    %721 = vmatpush.bf16.msra.mxu0 %v326
    %722 = vmatpush.bf16.msra.mxu0 %v322
    %723 = vmatpush.bf16.msra.mxu0 %v318
    %724 = vmatpush.bf16.msra.mxu0 %v314
    %725 = vmatmul.bf16.gmra.mxu0 %v677
    %v726 = vpop.f32.mrf.mxu0
    %v727 = vadd.f32 0.0, %v726
    %v728 = vpop.f32.mrf.mxu0
    %729 = vdwg.mxu0
    %v734 = vrot.slane %v701, 7
    %v735 = vrot.slane %v714, 6
    %v736 = vrot.slane %v727, 5
    %v737 = vsel %vm434, %v688, %v734
    %v738 = vsel %vm436, %v735, %v736
    %v739 = vsel %vm438, %v737, %v738
    %v741 = vadd.f32 %v676, %v739
    %v742 = vxor.u32 %v741, 2147483648
    %v743 = vmul.f32 %v742, 1.442695
    %v744 = vpow.pop %v743
    %v745 = vadd.f32 %v744, 1.0
    %v746 = vrcp.pop %v745
    %v747 = vmul.f32 %v745, %v746
    %v748 = vsub.f32 1.0, %v747
    %v749 = vmul.f32 %v746, %v748
    %v750 = vadd.f32 %v746, %v749
    %vm751 = vweird.f32 %v745
    %vm752 = vweird.f32 %v746
    %vm753 = vmor %vm751, %vm752
    %v754 = vsel %vm753, %v746, %v750
    %v755 = vand.u32 2147483647, %v745
    %vm756 = vcmp.eq.f32.partialorder %v755, 8.507059e+37
    %v757 = vand.u32 %v745, 2147483648
    %v758 = vor.u32 1.1754944e-38, %v757
    %v759 = vsel %vm756, %v758, %v754
    %v760 = vmul.f32 1.0, %v759
    %v762 = vrot.slane %v741, 3
    %v764 = vtanh.pop %v762
    %v766 = vrot.slane %v760, 1
    %v768 = vmul.f32 %v766, %v670
    %v769 = vmul.f32 %v760, %v764
    %v770 = vadd.f32 %v768, %v769
    %v771 = vtanh.pop %v770
    %v772 = vrot.slane %v760, 2
    %v774 = vmul.f32 %v772, %v771
    %s775 = scalar_lea.vmem [#allocation2], 4
    %v776 = vld [vmem:[%s775] ss:$8 sm:$0xf]
    %v777 = vpack.c.bf16 %v774, %v774
    %778 = vmatpush.bf16.msra.mxu0 %v339
    %779 = vmatpush.bf16.msra.mxu0 %v335
    %780 = vmatpush.bf16.msra.mxu0 %v331
    %781 = vmatpush.bf16.msra.mxu0 %v327
    %782 = vmatpush.bf16.msra.mxu0 %v323
    %783 = vmatpush.bf16.msra.mxu0 %v319
    %784 = vmatpush.bf16.msra.mxu0 %v315
    %785 = vmatpush.bf16.msra.mxu0 %v311
    %786 = vmatmul.bf16.gmra.mxu0 %v777
    %v787 = vpop.f32.mrf.mxu0
    %v788 = vadd.f32 0.0, %v787
    %v789 = vpop.f32.mrf.mxu0
    %790 = vdwg.mxu0
    %791 = vmatpush.bf16.msra.mxu0 %v340
    %792 = vmatpush.bf16.msra.mxu0 %v336
    %793 = vmatpush.bf16.msra.mxu0 %v332
    %794 = vmatpush.bf16.msra.mxu0 %v328
    %795 = vmatpush.bf16.msra.mxu0 %v324
    %796 = vmatpush.bf16.msra.mxu0 %v320
    %797 = vmatpush.bf16.msra.mxu0 %v316
    %798 = vmatpush.bf16.msra.mxu0 %v312
    %799 = vmatmul.bf16.gmra.mxu0 %v777
    %v800 = vpop.f32.mrf.mxu0
    %v801 = vadd.f32 0.0, %v800
    %v802 = vpop.f32.mrf.mxu0
    %803 = vdwg.mxu0
    %804 = vmatpush.bf16.msra.mxu0 %v341
    %805 = vmatpush.bf16.msra.mxu0 %v337
    %806 = vmatpush.bf16.msra.mxu0 %v333
    %807 = vmatpush.bf16.msra.mxu0 %v329
    %808 = vmatpush.bf16.msra.mxu0 %v325
    %809 = vmatpush.bf16.msra.mxu0 %v321
    %810 = vmatpush.bf16.msra.mxu0 %v317
    %811 = vmatpush.bf16.msra.mxu0 %v313
    %812 = vmatmul.bf16.gmra.mxu0 %v777
    %v813 = vpop.f32.mrf.mxu0
    %v814 = vadd.f32 0.0, %v813
    %v815 = vpop.f32.mrf.mxu0
    %816 = vdwg.mxu0
    %817 = vmatpush.bf16.msra.mxu0 %v342
    %818 = vmatpush.bf16.msra.mxu0 %v338
    %819 = vmatpush.bf16.msra.mxu0 %v334
    %820 = vmatpush.bf16.msra.mxu0 %v330
    %821 = vmatpush.bf16.msra.mxu0 %v326
    %822 = vmatpush.bf16.msra.mxu0 %v322
    %823 = vmatpush.bf16.msra.mxu0 %v318
    %824 = vmatpush.bf16.msra.mxu0 %v314
    %825 = vmatmul.bf16.gmra.mxu0 %v777
    %v826 = vpop.f32.mrf.mxu0
    %v827 = vadd.f32 0.0, %v826
    %v828 = vpop.f32.mrf.mxu0
    %829 = vdwg.mxu0
    %v834 = vrot.slane %v801, 7
    %v835 = vrot.slane %v814, 6
    %v836 = vrot.slane %v827, 5
    %v837 = vsel %vm434, %v788, %v834
    %v838 = vsel %vm436, %v835, %v836
    %v839 = vsel %vm438, %v837, %v838
    %v841 = vadd.f32 %v776, %v839
    %v842 = vxor.u32 %v841, 2147483648
    %v843 = vmul.f32 %v842, 1.442695
    %v844 = vpow.pop %v843
    %v845 = vadd.f32 %v844, 1.0
    %v846 = vrcp.pop %v845
    %v847 = vmul.f32 %v845, %v846
    %v848 = vsub.f32 1.0, %v847
    %v849 = vmul.f32 %v846, %v848
    %v850 = vadd.f32 %v846, %v849
    %vm851 = vweird.f32 %v845
    %vm852 = vweird.f32 %v846
    %vm853 = vmor %vm851, %vm852
    %v854 = vsel %vm853, %v846, %v850
    %v855 = vand.u32 2147483647, %v845
    %vm856 = vcmp.eq.f32.partialorder %v855, 8.507059e+37
    %v857 = vand.u32 %v845, 2147483648
    %v858 = vor.u32 1.1754944e-38, %v857
    %v859 = vsel %vm856, %v858, %v854
    %v860 = vmul.f32 1.0, %v859
    %v862 = vrot.slane %v841, 3
    %v864 = vtanh.pop %v862
    %v866 = vrot.slane %v860, 1
    %v868 = vmul.f32 %v866, %v770
    %v869 = vmul.f32 %v860, %v864
    %v870 = vadd.f32 %v868, %v869
    %v871 = vtanh.pop %v870
    %v872 = vrot.slane %v860, 2
    %v874 = vmul.f32 %v872, %v871
    %s875 = scalar_lea.vmem [#allocation2], 5
    %v876 = vld [vmem:[%s875] ss:$8 sm:$0xf]
    %v877 = vpack.c.bf16 %v874, %v874
    %878 = vmatpush.bf16.msra.mxu0 %v339
    %879 = vmatpush.bf16.msra.mxu0 %v335
    %880 = vmatpush.bf16.msra.mxu0 %v331
    %881 = vmatpush.bf16.msra.mxu0 %v327
    %882 = vmatpush.bf16.msra.mxu0 %v323
    %883 = vmatpush.bf16.msra.mxu0 %v319
    %884 = vmatpush.bf16.msra.mxu0 %v315
    %885 = vmatpush.bf16.msra.mxu0 %v311
    %886 = vmatmul.bf16.gmra.mxu0 %v877
    %v887 = vpop.f32.mrf.mxu0
    %v888 = vadd.f32 0.0, %v887
    %v889 = vpop.f32.mrf.mxu0
    %890 = vdwg.mxu0
    %891 = vmatpush.bf16.msra.mxu0 %v340
    %892 = vmatpush.bf16.msra.mxu0 %v336
    %893 = vmatpush.bf16.msra.mxu0 %v332
    %894 = vmatpush.bf16.msra.mxu0 %v328
    %895 = vmatpush.bf16.msra.mxu0 %v324
    %896 = vmatpush.bf16.msra.mxu0 %v320
    %897 = vmatpush.bf16.msra.mxu0 %v316
    %898 = vmatpush.bf16.msra.mxu0 %v312
    %899 = vmatmul.bf16.gmra.mxu0 %v877
    %v900 = vpop.f32.mrf.mxu0
    %v901 = vadd.f32 0.0, %v900
    %v902 = vpop.f32.mrf.mxu0
    %903 = vdwg.mxu0
    %904 = vmatpush.bf16.msra.mxu0 %v341
    %905 = vmatpush.bf16.msra.mxu0 %v337
    %906 = vmatpush.bf16.msra.mxu0 %v333
    %907 = vmatpush.bf16.msra.mxu0 %v329
    %908 = vmatpush.bf16.msra.mxu0 %v325
    %909 = vmatpush.bf16.msra.mxu0 %v321
    %910 = vmatpush.bf16.msra.mxu0 %v317
    %911 = vmatpush.bf16.msra.mxu0 %v313
    %912 = vmatmul.bf16.gmra.mxu0 %v877
    %v913 = vpop.f32.mrf.mxu0
    %v914 = vadd.f32 0.0, %v913
    %v915 = vpop.f32.mrf.mxu0
    %916 = vdwg.mxu0
    %917 = vmatpush.bf16.msra.mxu0 %v342
    %918 = vmatpush.bf16.msra.mxu0 %v338
    %919 = vmatpush.bf16.msra.mxu0 %v334
    %920 = vmatpush.bf16.msra.mxu0 %v330
    %921 = vmatpush.bf16.msra.mxu0 %v326
    %922 = vmatpush.bf16.msra.mxu0 %v322
    %923 = vmatpush.bf16.msra.mxu0 %v318
    %924 = vmatpush.bf16.msra.mxu0 %v314
    %925 = vmatmul.bf16.gmra.mxu0 %v877
    %v926 = vpop.f32.mrf.mxu0
    %v927 = vadd.f32 0.0, %v926
    %v928 = vpop.f32.mrf.mxu0
    %929 = vdwg.mxu0
    %v934 = vrot.slane %v901, 7
    %v935 = vrot.slane %v914, 6
    %v936 = vrot.slane %v927, 5
    %v937 = vsel %vm434, %v888, %v934
    %v938 = vsel %vm436, %v935, %v936
    %v939 = vsel %vm438, %v937, %v938
    %v941 = vadd.f32 %v876, %v939
    %v942 = vxor.u32 %v941, 2147483648
    %v943 = vmul.f32 %v942, 1.442695
    %v944 = vpow.pop %v943
    %v945 = vadd.f32 %v944, 1.0
    %v946 = vrcp.pop %v945
    %v947 = vmul.f32 %v945, %v946
    %v948 = vsub.f32 1.0, %v947
    %v949 = vmul.f32 %v946, %v948
    %v950 = vadd.f32 %v946, %v949
    %vm951 = vweird.f32 %v945
    %vm952 = vweird.f32 %v946
    %vm953 = vmor %vm951, %vm952
    %v954 = vsel %vm953, %v946, %v950
    %v955 = vand.u32 2147483647, %v945
    %vm956 = vcmp.eq.f32.partialorder %v955, 8.507059e+37
    %v957 = vand.u32 %v945, 2147483648
    %v958 = vor.u32 1.1754944e-38, %v957
    %v959 = vsel %vm956, %v958, %v954
    %v960 = vmul.f32 1.0, %v959
    %v962 = vrot.slane %v941, 3
    %v964 = vtanh.pop %v962
    %v966 = vrot.slane %v960, 1
    %v968 = vmul.f32 %v966, %v870
    %v969 = vmul.f32 %v960, %v964
    %v970 = vadd.f32 %v968, %v969
    %v971 = vtanh.pop %v970
    %v972 = vrot.slane %v960, 2
    %v974 = vmul.f32 %v972, %v971
    %s975 = scalar_lea.vmem [#allocation2], 6
    %v976 = vld [vmem:[%s975] ss:$8 sm:$0xf]
    %v977 = vpack.c.bf16 %v974, %v974
    %978 = vmatpush.bf16.msra.mxu0 %v339
    %979 = vmatpush.bf16.msra.mxu0 %v335
    %980 = vmatpush.bf16.msra.mxu0 %v331
    %981 = vmatpush.bf16.msra.mxu0 %v327
    %982 = vmatpush.bf16.msra.mxu0 %v323
    %983 = vmatpush.bf16.msra.mxu0 %v319
    %984 = vmatpush.bf16.msra.mxu0 %v315
    %985 = vmatpush.bf16.msra.mxu0 %v311
    %986 = vmatmul.bf16.gmra.mxu0 %v977
    %v987 = vpop.f32.mrf.mxu0
    %v988 = vadd.f32 0.0, %v987
    %v989 = vpop.f32.mrf.mxu0
    %990 = vdwg.mxu0
    %991 = vmatpush.bf16.msra.mxu0 %v340
    %992 = vmatpush.bf16.msra.mxu0 %v336
    %993 = vmatpush.bf16.msra.mxu0 %v332
    %994 = vmatpush.bf16.msra.mxu0 %v328
    %995 = vmatpush.bf16.msra.mxu0 %v324
    %996 = vmatpush.bf16.msra.mxu0 %v320
    %997 = vmatpush.bf16.msra.mxu0 %v316
    %998 = vmatpush.bf16.msra.mxu0 %v312
    %999 = vmatmul.bf16.gmra.mxu0 %v977
    %v1000 = vpop.f32.mrf.mxu0
    %v1001 = vadd.f32 0.0, %v1000
    %v1002 = vpop.f32.mrf.mxu0
    %1003 = vdwg.mxu0
    %1004 = vmatpush.bf16.msra.mxu0 %v341
    %1005 = vmatpush.bf16.msra.mxu0 %v337
    %1006 = vmatpush.bf16.msra.mxu0 %v333
    %1007 = vmatpush.bf16.msra.mxu0 %v329
    %1008 = vmatpush.bf16.msra.mxu0 %v325
    %1009 = vmatpush.bf16.msra.mxu0 %v321
    %1010 = vmatpush.bf16.msra.mxu0 %v317
    %1011 = vmatpush.bf16.msra.mxu0 %v313
    %1012 = vmatmul.bf16.gmra.mxu0 %v977
    %v1013 = vpop.f32.mrf.mxu0
    %v1014 = vadd.f32 0.0, %v1013
    %v1015 = vpop.f32.mrf.mxu0
    %1016 = vdwg.mxu0
    %1017 = vmatpush.bf16.msra.mxu0 %v342
    %1018 = vmatpush.bf16.msra.mxu0 %v338
    %1019 = vmatpush.bf16.msra.mxu0 %v334
    %1020 = vmatpush.bf16.msra.mxu0 %v330
    %1021 = vmatpush.bf16.msra.mxu0 %v326
    %1022 = vmatpush.bf16.msra.mxu0 %v322
    %1023 = vmatpush.bf16.msra.mxu0 %v318
    %1024 = vmatpush.bf16.msra.mxu0 %v314
    %1025 = vmatmul.bf16.gmra.mxu0 %v977
    %v1026 = vpop.f32.mrf.mxu0
    %v1027 = vadd.f32 0.0, %v1026
    %v1028 = vpop.f32.mrf.mxu0
    %1029 = vdwg.mxu0
    %v1034 = vrot.slane %v1001, 7
    %v1035 = vrot.slane %v1014, 6
    %v1036 = vrot.slane %v1027, 5
    %v1037 = vsel %vm434, %v988, %v1034
    %v1038 = vsel %vm436, %v1035, %v1036
    %v1039 = vsel %vm438, %v1037, %v1038
    %v1041 = vadd.f32 %v976, %v1039
    %v1042 = vxor.u32 %v1041, 2147483648
    %v1043 = vmul.f32 %v1042, 1.442695
    %v1044 = vpow.pop %v1043
    %v1045 = vadd.f32 %v1044, 1.0
    %v1046 = vrcp.pop %v1045
    %v1047 = vmul.f32 %v1045, %v1046
    %v1048 = vsub.f32 1.0, %v1047
    %v1049 = vmul.f32 %v1046, %v1048
    %v1050 = vadd.f32 %v1046, %v1049
    %vm1051 = vweird.f32 %v1045
    %vm1052 = vweird.f32 %v1046
    %vm1053 = vmor %vm1051, %vm1052
    %v1054 = vsel %vm1053, %v1046, %v1050
    %v1055 = vand.u32 2147483647, %v1045
    %vm1056 = vcmp.eq.f32.partialorder %v1055, 8.507059e+37
    %v1057 = vand.u32 %v1045, 2147483648
    %v1058 = vor.u32 1.1754944e-38, %v1057
    %v1059 = vsel %vm1056, %v1058, %v1054
    %v1060 = vmul.f32 1.0, %v1059
    %v1062 = vrot.slane %v1041, 3
    %v1064 = vtanh.pop %v1062
    %v1066 = vrot.slane %v1060, 1
    %v1068 = vmul.f32 %v1066, %v970
    %v1069 = vmul.f32 %v1060, %v1064
    %v1070 = vadd.f32 %v1068, %v1069
    %v1071 = vtanh.pop %v1070
    %v1072 = vrot.slane %v1060, 2
    %v1074 = vmul.f32 %v1072, %v1071
    %s1075 = scalar_lea.vmem [#allocation2], 7
    %v1076 = vld [vmem:[%s1075] ss:$8 sm:$0xf]
    %v1077 = vpack.c.bf16 %v1074, %v1074
    %1078 = vmatpush.bf16.msra.mxu0 %v339
    %1079 = vmatpush.bf16.msra.mxu0 %v335
    %1080 = vmatpush.bf16.msra.mxu0 %v331
    %1081 = vmatpush.bf16.msra.mxu0 %v327
    %1082 = vmatpush.bf16.msra.mxu0 %v323
    %1083 = vmatpush.bf16.msra.mxu0 %v319
    %1084 = vmatpush.bf16.msra.mxu0 %v315
    %1085 = vmatpush.bf16.msra.mxu0 %v311
    %1086 = vmatmul.bf16.gmra.mxu0 %v1077
    %v1087 = vpop.f32.mrf.mxu0
    %v1088 = vadd.f32 0.0, %v1087
    %v1089 = vpop.f32.mrf.mxu0
    %1090 = vdwg.mxu0
    %1091 = vmatpush.bf16.msra.mxu0 %v340
    %1092 = vmatpush.bf16.msra.mxu0 %v336
    %1093 = vmatpush.bf16.msra.mxu0 %v332
    %1094 = vmatpush.bf16.msra.mxu0 %v328
    %1095 = vmatpush.bf16.msra.mxu0 %v324
    %1096 = vmatpush.bf16.msra.mxu0 %v320
    %1097 = vmatpush.bf16.msra.mxu0 %v316
    %1098 = vmatpush.bf16.msra.mxu0 %v312
    %1099 = vmatmul.bf16.gmra.mxu0 %v1077
    %v1100 = vpop.f32.mrf.mxu0
    %v1101 = vadd.f32 0.0, %v1100
    %v1102 = vpop.f32.mrf.mxu0
    %1103 = vdwg.mxu0
    %1104 = vmatpush.bf16.msra.mxu0 %v341
    %1105 = vmatpush.bf16.msra.mxu0 %v337
    %1106 = vmatpush.bf16.msra.mxu0 %v333
    %1107 = vmatpush.bf16.msra.mxu0 %v329
    %1108 = vmatpush.bf16.msra.mxu0 %v325
    %1109 = vmatpush.bf16.msra.mxu0 %v321
    %1110 = vmatpush.bf16.msra.mxu0 %v317
    %1111 = vmatpush.bf16.msra.mxu0 %v313
    %1112 = vmatmul.bf16.gmra.mxu0 %v1077
    %v1113 = vpop.f32.mrf.mxu0
    %v1114 = vadd.f32 0.0, %v1113
    %v1115 = vpop.f32.mrf.mxu0
    %1116 = vdwg.mxu0
    %1117 = vmatpush.bf16.msra.mxu0 %v342
    %1118 = vmatpush.bf16.msra.mxu0 %v338
    %1119 = vmatpush.bf16.msra.mxu0 %v334
    %1120 = vmatpush.bf16.msra.mxu0 %v330
    %1121 = vmatpush.bf16.msra.mxu0 %v326
    %1122 = vmatpush.bf16.msra.mxu0 %v322
    %1123 = vmatpush.bf16.msra.mxu0 %v318
    %1124 = vmatpush.bf16.msra.mxu0 %v314
    %1125 = vmatmul.bf16.gmra.mxu0 %v1077
    %v1126 = vpop.f32.mrf.mxu0
    %v1127 = vadd.f32 0.0, %v1126
    %v1128 = vpop.f32.mrf.mxu0
    %1129 = vdwg.mxu0
    %v1134 = vrot.slane %v1101, 7
    %v1135 = vrot.slane %v1114, 6
    %v1136 = vrot.slane %v1127, 5
    %v1137 = vsel %vm434, %v1088, %v1134
    %v1138 = vsel %vm436, %v1135, %v1136
    %v1139 = vsel %vm438, %v1137, %v1138
    %v1141 = vadd.f32 %v1076, %v1139
    %v1142 = vxor.u32 %v1141, 2147483648
    %v1143 = vmul.f32 %v1142, 1.442695
    %v1144 = vpow.pop %v1143
    %v1145 = vadd.f32 %v1144, 1.0
    %v1146 = vrcp.pop %v1145
    %v1147 = vmul.f32 %v1145, %v1146
    %v1148 = vsub.f32 1.0, %v1147
    %v1149 = vmul.f32 %v1146, %v1148
    %v1150 = vadd.f32 %v1146, %v1149
    %vm1151 = vweird.f32 %v1145
    %vm1152 = vweird.f32 %v1146
    %vm1153 = vmor %vm1151, %vm1152
    %v1154 = vsel %vm1153, %v1146, %v1150
    %v1155 = vand.u32 2147483647, %v1145
    %vm1156 = vcmp.eq.f32.partialorder %v1155, 8.507059e+37
    %v1157 = vand.u32 %v1145, 2147483648
    %v1158 = vor.u32 1.1754944e-38, %v1157
    %v1159 = vsel %vm1156, %v1158, %v1154
    %v1160 = vmul.f32 1.0, %v1159
    %v1162 = vrot.slane %v1141, 3
    %v1164 = vtanh.pop %v1162
    %v1166 = vrot.slane %v1160, 1
    %v1168 = vmul.f32 %v1166, %v1070
    %v1169 = vmul.f32 %v1160, %v1164
    %v1170 = vadd.f32 %v1168, %v1169
    %v1171 = vtanh.pop %v1170
    %v1172 = vrot.slane %v1160, 2
    %v1174 = vmul.f32 %v1172, %v1171
    %v1176 = vperm.slane %v574, 0
    %v1179 = vperm.slane %v674, 0
    %v1182 = vperm.slane %v774, 0
    %v1185 = vperm.slane %v874, 0
    %v1188 = vperm.slane %v974, 0
    %v1191 = vperm.slane %v1074, 0
    %v1194 = vperm.slane %v1174, 0
    %v1196 = vsel %vm434, %v474, %v1176
    %v1197 = vsel %vm438, %v1196, %v1179
    %vm1198 = vcmask 1042432
    %v1199 = vsel %vm1198, %v1197, %v1182
    %vm1200 = vcmask 1043456
    %v1201 = vsel %vm1200, %v1199, %v1185
    %vm1202 = vcmask 1044480
    %v1203 = vsel %vm1202, %v1201, %v1188
    %vm1204 = vcmask 1045504
    %v1205 = vsel %vm1204, %v1203, %v1191
    %vm1206 = vcmask 1046528
    %v1207 = vsel %vm1206, %v1205, %v1194
    %1208 = vst [vmem:[#allocation13] sm:$0xff] %v1207
    %1209 = vst [vmem:[#allocation3] sm:$0x1] %v1174
    %1210 = vst [vmem:[#allocation4] sm:$0x1] %v1170
    // Predicated region
    $region38: #{tpu_custom_call.1} parent=1 // pred_check
      _
    $region39: #{tpu_custom_call.1} parent=1 // pred_check_branch
      %1212 = sbr.rel (0) target = $region41
    $region40: #{tpu_custom_call.1} parent=1 // pred_region
      %1214 = vsyncadd [#allocation7], 0
      %s1216 = sshll.u32 [#allocation13], 4
      %s1217 = int_to_ptr.vmem [resolvable:$true] %s1216
      %s1218 = sshll.u32 %s4, 4
      %s1219 = int_to_ptr.hbm [resolvable:$true] %s1218
      %1221 = dma.vmem_to_hbm [thread:$0]  %s1217, 128, %s1219, [#allocation7]
    $region41: #{tpu_custom_call.1} parent=1 // pred_fallthru
      _
    // Predicated region
    $region42: #{tpu_custom_call.1} parent=1 // pred_check
      _
    $region43: #{tpu_custom_call.1} parent=1 // pred_check_branch
      %1223 = sbr.rel (0) target = $region45
    $region44: #{tpu_custom_call.1} parent=1 // pred_region
      %1225 = dma.done [#allocation7], 128
    $region45: #{tpu_custom_call.1} parent=1 // pred_fallthru
      _
    %1226 = vsyncpa [#allocation6], 1
    %1227 = vsyncpa [#allocation9], 1
    %1228 = vsyncpa [#allocation12], 1
    %1229 = vsyncpa [#allocation7], 1

</llo_original>
